<compile_context>
chip_gen: v7x
topology: tpu7x:2x2x1
jax: 0.10.0
libtpu: 0.0.40
codegen_flags: <defaults>
</compile_context>

<pallas_src>
import functools

import jax
import jax.numpy as jnp
from jax import lax
from jax.experimental import pallas as pl
from jax.experimental.pallas import tpu as pltpu


def mixconv_kernel(x_ref, w_ref, bias_ref, out_ref, *, H):
    # x_ref   : (Mb, W*C1)      Mb = images_per_tile * H packed rows
    # w_ref   : (3*W*C1, W*C2)  banded block-Toeplitz weight, BN scale folded
    # bias_ref: (1, W*C2)       folded BN bias, tiled to packed lanes
    # out_ref : (Mb, W*C2)
    Mb = x_ref.shape[0]
    x = x_ref[...]                                          # f32

    # Row index within the image. Tiles hold whole images and start on image
    # boundaries, so the tile-local row index modulo H equals h.
    row = lax.broadcasted_iota(jnp.int32, x.shape, 0)
    h = row % H

    # dy = -1 / +1 neighbours via sublane rotation (XLU slot, cheap) plus the
    # SAME-padding edge mask. pltpu.roll requires non-negative shifts:
    # shift = Mb - 1 is the cyclic equivalent of -1. Rows contaminated by the
    # wrap (across images or the tile edge) are exactly the masked ones.
    x_up = jnp.where(h == 0, 0.0, pltpu.roll(x, shift=1, axis=0))       # x[h-1]
    x_dn = jnp.where(h == H - 1, 0.0, pltpu.roll(x, shift=Mb - 1, axis=0))  # x[h+1]

    # One im2col-style MXU matmul per tile (K = 3*W*C1). Operands go to the
    # weight's dtype (f32 or bf16); accumulation is always f32.
    mm_dtype = w_ref.dtype
    xs = jnp.concatenate([x_up, x, x_dn], axis=1).astype(mm_dtype)   # (Mb, 3*W*C1)
    prec = lax.Precision.HIGHEST if mm_dtype == jnp.float32 else None
    acc = jnp.dot(xs, w_ref[...], precision=prec,
                  preferred_element_type=jnp.float32)                # (Mb, W*C2)

    # Folded BN bias + LeakyReLU(0.1) + residual add, f32, lane-dense store.
    y = acc + bias_ref[...]
    y = jnp.where(y > 0, y, 0.1 * y)
    out_ref[...] = (x + y).astype(out_ref.dtype)


def prepare_mixconv_params(w1, w3, gamma, beta, run_mean, run_var, *, W,
                           matmul_dtype=jnp.float32, eps=1e-5):
    """One-time host-side construction of the fused weight / bias.

    w1: (1,1,C1,c0) HWIO 1x1 branch, w3: (3,3,C1,c1b) HWIO 3x3 branch.
    Returns
      w_cat : (3*W*C1, W*C2) banded block-Toeplitz conv weight with the
              eval-mode BN scale folded into its output-channel columns.
      bias_t: (1, W*C2) folded BN bias tiled to the packed lane layout.
    """
    C1 = w1.shape[2]
    c0 = w1.shape[3]
    C2 = c0 + w3.shape[3]
    inv = gamma / jnp.sqrt(run_var + eps)

    # Combined per-tap weight (3, 3, C1, C2): 1x1 branch at the centre tap in
    # the first c0 output channels, 3x3 branch in the remaining channels.
    w_full = jnp.zeros((3, 3, C1, C2), dtype=jnp.float32)
    w_full = w_full.at[:, :, :, c0:].set(w3.astype(jnp.float32))
    w_full = w_full.at[1, 1, :, :c0].set(w1[0, 0].astype(jnp.float32))
    # Fold the BN scale into the weight (per output channel) -> no in-kernel
    # scale multiply, epilogue is one add.
    w_full = w_full * inv[None, None, None, :]

    # Banded block-Toeplitz weight (3*W*C1, W*C2): the dx taps and the SAME
    # padding zero columns live in the band structure; dy taps are stacked
    # along K so the kernel does a single matmul.
    bands = []
    for dy in range(3):
        band = jnp.zeros((W * C1, W * C2), dtype=jnp.float32)
        for dx in range(3):
            band = band + jnp.kron(
                jnp.eye(W, W, k=1 - dx, dtype=jnp.float32), w_full[dy, dx])
        bands.append(band)
    w_cat = jnp.concatenate(bands, axis=0).astype(matmul_dtype)

    bias_t = (beta - run_mean * inv).astype(jnp.float32)
    bias_t = jnp.tile(bias_t, W).reshape(1, W * C2)
    return w_cat, bias_t


@jax.jit
def mixconv2d_packed(x_packed, w_cat, bias_t):
    """Packed-layout entry point: x_packed is (N, H, W*C1), channels-last on lanes."""
    N, H, WC1 = x_packed.shape
    WC2 = bias_t.shape[-1]
    assert WC1 == WC2, "MixConv2d residual add requires c1 == c2"

    # Flatten (N, H) -> M so one grid step feeds the MXU ~TARGET_M rows
    # (256 fills the v6e/v7x MXU; >=128 fills v5e). Tiles are whole images so
    # the in-kernel roll+mask stays exact. On v7x, if N allows, keeping >=2
    # grid steps on this "parallel" axis engages both TensorCores.
    TARGET_M = 256
    images_per_tile = max(1, min(N, TARGET_M // H))
    while N % images_per_tile:
        images_per_tile -= 1
    Mb = images_per_tile * H
    num_tiles = N // images_per_tile
    x_flat = x_packed.reshape(N * H, WC1)   # contiguous -> free reshape

    out_flat = pl.pallas_call(
        functools.partial(mixconv_kernel, H=H),
        out_shape=jax.ShapeDtypeStruct((N * H, WC2), jnp.float32),
        grid=(num_tiles,),
        in_specs=[
            pl.BlockSpec((Mb, WC1), lambda i: (i, 0)),
            pl.BlockSpec(w_cat.shape, lambda i: (0, 0)),
            pl.BlockSpec((1, WC2), lambda i: (0, 0)),
        ],
        out_specs=pl.BlockSpec((Mb, WC2), lambda i: (i, 0)),
        compiler_params=pltpu.CompilerParams(
            dimension_semantics=("parallel",)),
    )(x_flat, w_cat, bias_t)
    return out_flat.reshape(N, H, WC2)


@jax.jit
def mixconv2d_pallas(x_nchw, w_cat, bias_t):
    """NCHW wrapper matching the PyTorch module's I/O convention.

    In a full network, keep activations in the packed (N, H, W*C) layout
    across layers and call mixconv2d_packed directly: the two transposes here
    are HBM-bound XLA copies that only exist to honour the NCHW convention.
    """
    N, C1, H, W = x_nchw.shape
    x_packed = jnp.transpose(x_nchw, (0, 2, 3, 1)).reshape(N, H, W * C1)
    out_packed = mixconv2d_packed(x_packed, w_cat, bias_t)
    C2 = out_packed.shape[-1] // W
    return jnp.transpose(out_packed.reshape(N, H, W, C2), (0, 3, 1, 2))


def mixconv2d_reference(x_nchw, w1, w3, gamma, beta, run_mean, run_var):
    """Pure-JAX reference (conv_general_dilated), NHWC internally."""
    eps = 1e-5
    x = jnp.transpose(x_nchw, (0, 2, 3, 1))
    dn = ("NHWC", "HWIO", "NHWC")
    y1 = lax.conv_general_dilated(x, w1, (1, 1), "SAME", dimension_numbers=dn)
    y3 = lax.conv_general_dilated(x, w3, (1, 1), "SAME", dimension_numbers=dn)
    y = jnp.concatenate([y1, y3], axis=-1)
    y = (y - run_mean) / jnp.sqrt(run_var + eps) * gamma + beta
    y = jnp.where(y > 0, y, 0.1 * y)
    out = x + y
    return jnp.transpose(out, (0, 3, 1, 2))


if __name__ == "__main__":
    # MixConv2d(c1=8, c2=8, k=(1,3), equal_ch=True) -> equal split: c_ = [4, 4]
    c1, c2 = 8, 8
    c_split = (4, 4)
    N, H, W = 2, 16, 16

    key = jax.random.PRNGKey(0)
    k_x, k_w1, k_w3, k_g, k_b, k_m, k_v = jax.random.split(key, 7)

    x = jax.random.normal(k_x, (N, c1, H, W), dtype=jnp.float32)
    # Conv weights in HWIO layout (bias=False in the module).
    w1 = jax.random.normal(k_w1, (1, 1, c1, c_split[0]), dtype=jnp.float32) * 0.2
    w3 = jax.random.normal(k_w3, (3, 3, c1, c_split[1]), dtype=jnp.float32) * 0.1
    # BatchNorm2d(c2) parameters / running stats (deterministic, non-trivial).
    gamma = 1.0 + 0.1 * jax.random.normal(k_g, (c2,), dtype=jnp.float32)
    beta = 0.1 * jax.random.normal(k_b, (c2,), dtype=jnp.float32)
    run_mean = 0.1 * jax.random.normal(k_m, (c2,), dtype=jnp.float32)
    run_var = 1.0 + 0.1 * jax.random.uniform(k_v, (c2,), dtype=jnp.float32)

    ref = mixconv2d_reference(x, w1, w3, gamma, beta, run_mean, run_var)

    # f32 matmul-operand path (default): holds the tight 1e-4 check.
    w_cat, bias_t = prepare_mixconv_params(
        w1, w3, gamma, beta, run_mean, run_var, W=W, matmul_dtype=jnp.float32)
    out = jax.block_until_ready(mixconv2d_pallas(x, w_cat, bias_t))
    assert out.shape == (N, c2, H, W)
    assert jnp.allclose(out, ref, atol=1e-4, rtol=1e-4), "f32 mismatch vs reference"

    # bf16 matmul-operand path (perf mode): f32 accumulation + f32 epilogue,
    # checked at a looser tolerance consistent with bf16 operand rounding.
    w_cat_bf, bias_bf = prepare_mixconv_params(
        w1, w3, gamma, beta, run_mean, run_var, W=W, matmul_dtype=jnp.bfloat16)
    out_bf = jax.block_until_ready(mixconv2d_pallas(x, w_cat_bf, bias_bf))
    assert jnp.allclose(out_bf, ref, atol=5e-2, rtol=5e-2), "bf16 mismatch vs reference"

    print("KERNEL_OK")
</pallas_src>

<mosaic_0001>
module attributes {stable_mosaic.version = 11 : i64} {
  func.func @mixconv_kernel(%arg0: i32, %arg1: memref<32x128xf32, #tpu.memory_space<vmem>>, %arg2: memref<384x128xf32, #tpu.memory_space<vmem>>, %arg3: memref<1x128xf32, #tpu.memory_space<vmem>>, %arg4: memref<32x128xf32, #tpu.memory_space<vmem>>) attributes {dimension_semantics = [#tpu.dimension_semantics<parallel>], iteration_bounds = array<i64: 1>, scalar_prefetch = 0 : i64, scratch_operands = 0 : i64, tpu.core_type = #tpu.core_type<tc>, window_params = [{transform_indices = @transform_0, window_bounds = array<i64: 32, 128>}, {pipeline_mode = #tpu.pipeline_mode<synchronous>, transform_indices = @transform_1, window_bounds = array<i64: 384, 128>}, {pipeline_mode = #tpu.pipeline_mode<synchronous>, transform_indices = @transform_2, window_bounds = array<i64: 1, 128>}, {transform_indices = @transform_3, window_bounds = array<i64: 32, 128>}]} {
    %c0 = arith.constant 0 : index
    %c0_0 = arith.constant 0 : index
    %0 = vector.load %arg1[%c0, %c0_0] : memref<32x128xf32, #tpu.memory_space<vmem>>, vector<32x128xf32>
    %1 = tpu.iota {dimensions = array<i32: 0>} : vector<32x128xi32>
    %c16_i32 = arith.constant 16 : i32
    %c0_i32 = arith.constant 0 : i32
    %2 = arith.cmpi eq, %c16_i32, %c0_i32 : i32
    %c1_i32 = arith.constant 1 : i32
    %3 = arith.select %2, %c1_i32, %c16_i32 : i32
    %4 = vector.broadcast %3 : i32 to vector<32x128xi32>
    %5 = arith.remsi %1, %4 : vector<32x128xi32>
    %c0_i32_1 = arith.constant 0 : i32
    %6 = vector.broadcast %c0_i32_1 : i32 to vector<32x128xi32>
    %7 = arith.cmpi ne, %5, %6 : vector<32x128xi32>
    %c0_i32_2 = arith.constant 0 : i32
    %8 = vector.broadcast %c0_i32_2 : i32 to vector<32x128xi32>
    %9 = arith.cmpi slt, %5, %8 : vector<32x128xi32>
    %c0_i32_3 = arith.constant 0 : i32
    %10 = arith.cmpi slt, %3, %c0_i32_3 : i32
    %11 = vector.broadcast %10 : i1 to vector<32x128xi1>
    %12 = vector.broadcast %11 : vector<32x128xi1> to vector<32x128xi1>
    %13 = arith.xori %9, %12 : vector<32x128xi1>
    %14 = arith.andi %13, %7 : vector<32x128xi1>
    %15 = vector.broadcast %3 : i32 to vector<32x128xi32>
    %16 = arith.addi %5, %15 : vector<32x128xi32>
    %17 = arith.select %14, %16, %5 : vector<32x128xi1>, vector<32x128xi32>
    %c0_i32_4 = arith.constant 0 : i32
    %18 = vector.broadcast %c0_i32_4 : i32 to vector<32x128xi32>
    %19 = arith.cmpi eq, %17, %18 : vector<32x128xi32>
    %c1_i32_5 = arith.constant 1 : i32
    %20 = tpu.dynamic_rotate %0 by %c1_i32_5 dim 0 : vector<32x128xf32>, i32 -> vector<32x128xf32>
    %cst = arith.constant 0.000000e+00 : f32
    %21 = vector.broadcast %cst : f32 to vector<32x128xf32>
    %22 = arith.select %19, %21, %20 : vector<32x128xi1>, vector<32x128xf32>
    %c15_i32 = arith.constant 15 : i32
    %23 = vector.broadcast %c15_i32 : i32 to vector<32x128xi32>
    %24 = arith.cmpi eq, %17, %23 : vector<32x128xi32>
    %c31_i32 = arith.constant 31 : i32
    %25 = tpu.dynamic_rotate %0 by %c31_i32 dim 0 : vector<32x128xf32>, i32 -> vector<32x128xf32>
    %cst_6 = arith.constant 0.000000e+00 : f32
    %26 = vector.broadcast %cst_6 : f32 to vector<32x128xf32>
    %27 = arith.select %24, %26, %25 : vector<32x128xi1>, vector<32x128xf32>
    %28 = tpu.concatenate %22, %0, %27 in 1 : vector<32x128xf32>, vector<32x128xf32>, vector<32x128xf32> -> vector<32x384xf32>
    %c0_7 = arith.constant 0 : index
    %c0_8 = arith.constant 0 : index
    %29 = vector.load %arg2[%c0_7, %c0_8] : memref<384x128xf32, #tpu.memory_space<vmem>>, vector<384x128xf32>
    %cst_9 = arith.constant dense<0.000000e+00> : vector<32x128xf32>
    %30 = tpu.matmul %28, %29, %cst_9 {dimension_numbers = #tpu.dot_dimension_numbers<[1], [0], [0], [1], [0, 0, 1, 1], [], []>, precision = #tpu.contract_precision<fp32>} : vector<32x384xf32>, vector<384x128xf32>, vector<32x128xf32> -> vector<32x128xf32>
    %c0_10 = arith.constant 0 : index
    %c0_11 = arith.constant 0 : index
    %31 = vector.load %arg3[%c0_10, %c0_11] : memref<1x128xf32, #tpu.memory_space<vmem>>, vector<1x128xf32>
    %32 = vector.broadcast %31 : vector<1x128xf32> to vector<32x128xf32>
    %33 = arith.addf %30, %32 : vector<32x128xf32>
    %cst_12 = arith.constant 0.000000e+00 : f32
    %34 = vector.broadcast %cst_12 : f32 to vector<32x128xf32>
    %35 = arith.cmpf ogt, %33, %34 : vector<32x128xf32>
    %cst_13 = arith.constant 1.000000e-01 : f32
    %36 = vector.broadcast %cst_13 : f32 to vector<32x128xf32>
    %37 = arith.mulf %36, %33 : vector<32x128xf32>
    %38 = arith.select %35, %33, %37 : vector<32x128xi1>, vector<32x128xf32>
    %39 = arith.addf %0, %38 : vector<32x128xf32>
    %c0_14 = arith.constant 0 : index
    %c0_15 = arith.constant 0 : index
    %40 = vector.load %arg4[%c0_14, %c0_15] : memref<32x128xf32, #tpu.memory_space<vmem>>, vector<32x128xf32>
    tpu.vector_store %arg4[%c0_14, %c0_15], %39 {strides = array<i32>} : memref<32x128xf32, #tpu.memory_space<vmem>>, vector<32x128xf32>,
    return
  }
  func.func @transform_0(%arg0: i32) -> (i32, i32) {
    %c0_i32 = arith.constant 0 : i32
    %c0_i32_0 = arith.constant 0 : i32
    return %arg0, %c0_i32 : i32, i32
  }
  func.func @transform_1(%arg0: i32) -> (i32, i32) {
    %c0_i32 = arith.constant 0 : i32
    %c0_i32_0 = arith.constant 0 : i32
    %c0_i32_1 = arith.constant 0 : i32
    return %c0_i32, %c0_i32_0 : i32, i32
  }
  func.func @transform_2(%arg0: i32) -> (i32, i32) {
    %c0_i32 = arith.constant 0 : i32
    %c0_i32_0 = arith.constant 0 : i32
    %c0_i32_1 = arith.constant 0 : i32
    return %c0_i32, %c0_i32_0 : i32, i32
  }
  func.func @transform_3(%arg0: i32) -> (i32, i32) {
    %c0_i32 = arith.constant 0 : i32
    %c0_i32_0 = arith.constant 0 : i32
    return %arg0, %c0_i32 : i32, i32
  }
}

</mosaic_0001>

<llo_original>
// kernel: mixconv2d_packed.1
$region0: #{mixconv2d_packed.1}
  #allocation0 [shape = 'u32[]', space=smem, size = 0x4, offset = 0x4, fixed_abs, tag = 'smem constant byte address 0x4 - core index']
  #allocation1 [shape = 'u32[144,128]{1,0:T(1,128)}', space=vmem, size = 0x12000, scoped, tag = 'internal scratch']
  %s0 = inlined_call_operand.hbm [shape: f32[32,128], index: 0, kind: input, shape index: {}]
  %s1 = inlined_call_operand.hbm [shape: f32[384,128], index: 1, kind: input, shape index: {}]
  %s2 = inlined_call_operand.vmem [shape: f32[1,128], index: 2, kind: input, shape index: {}]
  %s3 = inlined_call_operand.hbm [shape: f32[32,128], index: 3, kind: output, shape index: {}]
  %s4 = sld [smem:[#allocation0]]
  $region30: #{mixconv2d_packed.1} parent=0
    _
  %s6 = ssub.s32 1, %s4
  %s7 = scalar_select 0, %s6, %s4
  $region1: #{mixconv2d_packed.1} parent=0
    #allocation2 [shape = 'u8[16384]{0}', space=vmem, size = 0x4000, scoped, tag = 'input window, operand 0, single buffered']
    #allocation3 [shape = 's32[1]{0}', space=sflag, size = 0x4, scoped, tag = 'scoped memory for mixconv2d_packed.1']
    #allocation4 [shape = 's32[1]{0}', space=sflag, size = 0x4, scoped, tag = 'scoped memory for mixconv2d_packed.1']
    #allocation5 [shape = 'u8[196608]{0}', space=vmem, size = 0x30000, scoped, tag = 'input window, operand 1, single buffered']
    #allocation6 [shape = 's32[1]{0}', space=sflag, size = 0x4, scoped, tag = 'scoped memory for mixconv2d_packed.1']
    #allocation7 [shape = 'u8[16384]{0}', space=vmem, size = 0x4000, scoped, tag = 'output window, operand 0, single buffered']
    %8 = vsyncpa [#allocation3], 0
    %9 = vsyncpa [#allocation6], 0
    %10 = vsyncpa [#allocation4], 0
    // Predicated region
    $region2: #{mixconv2d_packed.1} parent=1 // pred_check
      _
    $region3: #{mixconv2d_packed.1} parent=1 // pred_check_branch
      %12 = sbr.rel (0) target = $region5
    $region4: #{mixconv2d_packed.1} parent=1 // pred_region
      %s14 = ssub.s32 512, 512
      %15 = vsyncadd [#allocation3], %s14
      %s16 = sshll.u32 [#allocation2], 4
      %s17 = int_to_ptr.vmem [resolvable:$true] %s16
      %22 = dma.hbm_to_vmem [thread:$0]  %s0, 512, %s17, [#allocation3], 128, 128, 8
    $region5: #{mixconv2d_packed.1} parent=1 // pred_fallthru
      _
    // Predicated region
    $region6: #{mixconv2d_packed.1} parent=1 // pred_check
      _
    $region7: #{mixconv2d_packed.1} parent=1 // pred_check_branch
      %24 = sbr.rel (0) target = $region9
    $region8: #{mixconv2d_packed.1} parent=1 // pred_region
      %s26 = ssub.s32 6144, 6144
      %27 = vsyncadd [#allocation6], %s26
      %s28 = sshll.u32 [#allocation5], 4
      %s29 = int_to_ptr.vmem [resolvable:$true] %s28
      %34 = dma.hbm_to_vmem [thread:$0]  %s1, 6144, %s29, [#allocation6], 128, 128, 8
    $region9: #{mixconv2d_packed.1} parent=1 // pred_fallthru
      _
    // Predicated region
    $region10: #{mixconv2d_packed.1} parent=1 // pred_check
      _
    $region11: #{mixconv2d_packed.1} parent=1 // pred_check_branch
      %36 = sbr.rel (0) target = $region13
    $region12: #{mixconv2d_packed.1} parent=1 // pred_region
      _
    $region13: #{mixconv2d_packed.1} parent=1 // pred_fallthru
      _
    // Predicated region
    $region14: #{mixconv2d_packed.1} parent=1 // pred_check
      _
    $region15: #{mixconv2d_packed.1} parent=1 // pred_check_branch
      %38 = sbr.rel (0) target = $region17
    $region16: #{mixconv2d_packed.1} parent=1 // pred_region
      %39 = dma.done [#allocation3], 512
    $region17: #{mixconv2d_packed.1} parent=1 // pred_fallthru
      _
    // Predicated region
    $region18: #{mixconv2d_packed.1} parent=1 // pred_check
      _
    $region19: #{mixconv2d_packed.1} parent=1 // pred_check_branch
      %41 = sbr.rel (0) target = $region21
    $region20: #{mixconv2d_packed.1} parent=1 // pred_region
      %42 = dma.done [#allocation6], 6144
    $region21: #{mixconv2d_packed.1} parent=1 // pred_fallthru
      _
    %v43 = vld [vmem:[#allocation2] sm:$0xff]
    %v44 = vld [vmem:[#allocation2 + $0x8] sm:$0xff]
    %v45 = vld [vmem:[#allocation2 + $0x10] sm:$0xff]
    %v46 = vld [vmem:[#allocation2 + $0x18] sm:$0xff]
    %v47 = vlaneseq
    %v48 = vshrl.u32 %v47, 7
    %v49 = vadd.s32 %v48, 8
    %v50 = vadd.s32 %v48, 16
    %v51 = vadd.s32 %v48, 24
    %vm52 = vcmp.lt.s32.totalorder %v48, 0
    %v53 = vsub.s32 0, %v48
    %v54 = vsel %vm52, %v53, %v48
    %v55 = vshrl.u32 %v54, 4
    %v56 = vand.u32 %v54, 15
    %v57 = vsub.s32 0, %v56
    %v58 = vsel %vm52, %v57, %v56
    %vm59 = vcmp.lt.s32.totalorder %v49, 0
    %v60 = vsub.s32 0, %v49
    %v61 = vsel %vm59, %v60, %v49
    %v62 = vshrl.u32 %v61, 4
    %v63 = vand.u32 %v61, 15
    %v64 = vsub.s32 0, %v63
    %v65 = vsel %vm59, %v64, %v63
    %vm66 = vcmp.lt.s32.totalorder %v50, 0
    %v67 = vsub.s32 0, %v50
    %v68 = vsel %vm66, %v67, %v50
    %v69 = vshrl.u32 %v68, 4
    %v70 = vand.u32 %v68, 15
    %v71 = vsub.s32 0, %v70
    %v72 = vsel %vm66, %v71, %v70
    %vm73 = vcmp.lt.s32.totalorder %v51, 0
    %v74 = vsub.s32 0, %v51
    %v75 = vsel %vm73, %v74, %v51
    %v76 = vshrl.u32 %v75, 4
    %v77 = vand.u32 %v75, 15
    %v78 = vsub.s32 0, %v77
    %v79 = vsel %vm73, %v78, %v77
    %vm80 = vcmp.ne.s32.totalorder %v58, 0
    %vm81 = vcmp.ne.s32.totalorder %v65, 0
    %vm82 = vcmp.ne.s32.totalorder %v72, 0
    %vm83 = vcmp.ne.s32.totalorder %v79, 0
    %vm84 = vcmp.lt.s32.totalorder %v58, 0
    %vm85 = vcmp.lt.s32.totalorder %v65, 0
    %vm86 = vcmp.lt.s32.totalorder %v72, 0
    %vm87 = vcmp.lt.s32.totalorder %v79, 0
    %vm88 = vmand %vm84, %vm80
    %vm89 = vmand %vm85, %vm81
    %vm90 = vmand %vm86, %vm82
    %vm91 = vmand %vm87, %vm83
    %v92 = vadd.s32 %v58, 16
    %v93 = vadd.s32 %v65, 16
    %v94 = vadd.s32 %v72, 16
    %v95 = vadd.s32 %v79, 16
    %v96 = vsel %vm88, %v92, %v58
    %v97 = vsel %vm89, %v93, %v65
    %v98 = vsel %vm90, %v94, %v72
    %v99 = vsel %vm91, %v95, %v79
    %vm100 = vcmp.eq.s32.totalorder %v96, 0
    %vm101 = vcmp.eq.s32.totalorder %v97, 0
    %vm102 = vcmp.eq.s32.totalorder %v98, 0
    %vm103 = vcmp.eq.s32.totalorder %v99, 0
    %v104 = vrot.slane %v43, 7
    %v105 = vrot.slane %v44, 7
    %v106 = vrot.slane %v45, 7
    %v107 = vrot.slane %v46, 7
    %vm108 = vcmp.lt.s32.totalorder %v48, 1
    %v109 = vsel %vm108, %v106, %v107
    %v110 = vsel %vm108, %v105, %v106
    %v111 = vsel %vm108, %v104, %v105
    %v112 = vsel %vm108, %v107, %v104
    %v113 = vsel %vm100, 0.0, %v112
    %v114 = vsel %vm101, 0.0, %v111
    %v115 = vsel %vm102, 0.0, %v110
    %v116 = vsel %vm103, 0.0, %v109
    %vm117 = vcmp.eq.s32.totalorder %v96, 15
    %vm118 = vcmp.eq.s32.totalorder %v97, 15
    %vm119 = vcmp.eq.s32.totalorder %v98, 15
    %vm120 = vcmp.eq.s32.totalorder %v99, 15
    %v121 = vrot.slane %v43, 1
    %v122 = vrot.slane %v44, 1
    %v123 = vrot.slane %v45, 1
    %v124 = vrot.slane %v46, 1
    %vm125 = vcmp.lt.s32.totalorder %v48, 7
    %v126 = vsel %vm125, %v123, %v124
    %v127 = vsel %vm125, %v122, %v123
    %v128 = vsel %vm125, %v121, %v122
    %v129 = vsel %vm125, %v124, %v121
    %v130 = vsel %vm117, 0.0, %v128
    %v131 = vsel %vm118, 0.0, %v127
    %v132 = vsel %vm119, 0.0, %v126
    %v133 = vsel %vm120, 0.0, %v129
    %v134 = vld [vmem:[#allocation5] sm:$0xff]
    %v135 = vld [vmem:[#allocation5 + $0x8] sm:$0xff]
    %v136 = vld [vmem:[#allocation5 + $0x10] sm:$0xff]
    %v137 = vld [vmem:[#allocation5 + $0x18] sm:$0xff]
    %v138 = vld [vmem:[#allocation5 + $0x20] sm:$0xff]
    %v139 = vld [vmem:[#allocation5 + $0x28] sm:$0xff]
    %v140 = vld [vmem:[#allocation5 + $0x30] sm:$0xff]
    %v141 = vld [vmem:[#allocation5 + $0x38] sm:$0xff]
    %v142 = vld [vmem:[#allocation5 + $0x40] sm:$0xff]
    %v143 = vld [vmem:[#allocation5 + $0x48] sm:$0xff]
    %v144 = vld [vmem:[#allocation5 + $0x50] sm:$0xff]
    %v145 = vld [vmem:[#allocation5 + $0x58] sm:$0xff]
    %v146 = vld [vmem:[#allocation5 + $0x60] sm:$0xff]
    %v147 = vld [vmem:[#allocation5 + $0x68] sm:$0xff]
    %v148 = vld [vmem:[#allocation5 + $0x70] sm:$0xff]
    %v149 = vld [vmem:[#allocation5 + $0x78] sm:$0xff]
    %v150 = vld [vmem:[#allocation5 + $0x80] sm:$0xff]
    %v151 = vld [vmem:[#allocation5 + $0x88] sm:$0xff]
    %v152 = vld [vmem:[#allocation5 + $0x90] sm:$0xff]
    %v153 = vld [vmem:[#allocation5 + $0x98] sm:$0xff]
    %v154 = vld [vmem:[#allocation5 + $0xa0] sm:$0xff]
    %v155 = vld [vmem:[#allocation5 + $0xa8] sm:$0xff]
    %v156 = vld [vmem:[#allocation5 + $0xb0] sm:$0xff]
    %v157 = vld [vmem:[#allocation5 + $0xb8] sm:$0xff]
    %v158 = vld [vmem:[#allocation5 + $0xc0] sm:$0xff]
    %v159 = vld [vmem:[#allocation5 + $0xc8] sm:$0xff]
    %v160 = vld [vmem:[#allocation5 + $0xd0] sm:$0xff]
    %v161 = vld [vmem:[#allocation5 + $0xd8] sm:$0xff]
    %v162 = vld [vmem:[#allocation5 + $0xe0] sm:$0xff]
    %v163 = vld [vmem:[#allocation5 + $0xe8] sm:$0xff]
    %v164 = vld [vmem:[#allocation5 + $0xf0] sm:$0xff]
    %v165 = vld [vmem:[#allocation5 + $0xf8] sm:$0xff]
    %v166 = vld [vmem:[#allocation5 + $0x100] sm:$0xff]
    %v167 = vld [vmem:[#allocation5 + $0x108] sm:$0xff]
    %v168 = vld [vmem:[#allocation5 + $0x110] sm:$0xff]
    %v169 = vld [vmem:[#allocation5 + $0x118] sm:$0xff]
    %v170 = vld [vmem:[#allocation5 + $0x120] sm:$0xff]
    %v171 = vld [vmem:[#allocation5 + $0x128] sm:$0xff]
    %v172 = vld [vmem:[#allocation5 + $0x130] sm:$0xff]
    %v173 = vld [vmem:[#allocation5 + $0x138] sm:$0xff]
    %v174 = vld [vmem:[#allocation5 + $0x140] sm:$0xff]
    %v175 = vld [vmem:[#allocation5 + $0x148] sm:$0xff]
    %v176 = vld [vmem:[#allocation5 + $0x150] sm:$0xff]
    %v177 = vld [vmem:[#allocation5 + $0x158] sm:$0xff]
    %v178 = vld [vmem:[#allocation5 + $0x160] sm:$0xff]
    %v179 = vld [vmem:[#allocation5 + $0x168] sm:$0xff]
    %v180 = vld [vmem:[#allocation5 + $0x170] sm:$0xff]
    %v181 = vld [vmem:[#allocation5 + $0x178] sm:$0xff]
    %v182 = vld [vmem:[%s2] sm:$0x1]
    %v184 = vlaneseq
    %v185 = vshrl.u32 %v184, 7
    %v186 = vsub.s32 0, %v185
    %v187 = vrot.slane %v182, %v186
    %189 = vmatprep.subr.mxu0 0.0
    %v190 = vand.u32 %v134, 4294901760
    %191 = vmatpush1.msra.mxu0 %v190
    %192 = vmatprep.subr.mxu0 0.0
    %v193 = vand.u32 %v135, 4294901760
    %194 = vmatpush1.msra.mxu0 %v193
    %195 = vmatprep.subr.mxu0 0.0
    %v196 = vand.u32 %v136, 4294901760
    %197 = vmatpush1.msra.mxu0 %v196
    %198 = vmatprep.subr.mxu0 0.0
    %v199 = vand.u32 %v137, 4294901760
    %200 = vmatpush1.msra.mxu0 %v199
    %201 = vmatprep.subr.mxu0 0.0
    %v202 = vand.u32 %v138, 4294901760
    %203 = vmatpush1.msra.mxu0 %v202
    %204 = vmatprep.subr.mxu0 0.0
    %v205 = vand.u32 %v139, 4294901760
    %206 = vmatpush1.msra.mxu0 %v205
    %207 = vmatprep.subr.mxu0 0.0
    %v208 = vand.u32 %v140, 4294901760
    %209 = vmatpush1.msra.mxu0 %v208
    %210 = vmatprep.subr.mxu0 0.0
    %v211 = vand.u32 %v141, 4294901760
    %212 = vmatpush1.msra.mxu0 %v211
    %213 = vmatprep.subr.mxu0 0.0
    %v214 = vand.u32 %v142, 4294901760
    %215 = vmatpush1.msra.mxu0 %v214
    %216 = vmatprep.subr.mxu0 0.0
    %v217 = vand.u32 %v143, 4294901760
    %218 = vmatpush1.msra.mxu0 %v217
    %219 = vmatprep.subr.mxu0 0.0
    %v220 = vand.u32 %v144, 4294901760
    %221 = vmatpush1.msra.mxu0 %v220
    %222 = vmatprep.subr.mxu0 0.0
    %v223 = vand.u32 %v145, 4294901760
    %224 = vmatpush1.msra.mxu0 %v223
    %225 = vmatprep.subr.mxu0 0.0
    %v226 = vand.u32 %v146, 4294901760
    %227 = vmatpush1.msra.mxu0 %v226
    %228 = vmatprep.subr.mxu0 0.0
    %v229 = vand.u32 %v147, 4294901760
    %230 = vmatpush1.msra.mxu0 %v229
    %231 = vmatprep.subr.mxu0 0.0
    %v232 = vand.u32 %v148, 4294901760
    %233 = vmatpush1.msra.mxu0 %v232
    %234 = vmatprep.subr.mxu0 0.0
    %v235 = vand.u32 %v149, 4294901760
    %236 = vmatpush1.msra.mxu0 %v235
    %237 = vmatprep.subr.mxu0 0.0
    %v238 = vand.u32 %v150, 4294901760
    %239 = vmatpush1.msra.mxu0 %v238
    %240 = vmatprep.subr.mxu0 0.0
    %v241 = vand.u32 %v151, 4294901760
    %242 = vmatpush1.msra.mxu0 %v241
    %243 = vmatprep.subr.mxu0 0.0
    %v244 = vand.u32 %v152, 4294901760
    %245 = vmatpush1.msra.mxu0 %v244
    %246 = vmatprep.subr.mxu0 0.0
    %v247 = vand.u32 %v153, 4294901760
    %248 = vmatpush1.msra.mxu0 %v247
    %249 = vmatprep.subr.mxu0 0.0
    %v250 = vand.u32 %v154, 4294901760
    %251 = vmatpush1.msra.mxu0 %v250
    %252 = vmatprep.subr.mxu0 0.0
    %v253 = vand.u32 %v155, 4294901760
    %254 = vmatpush1.msra.mxu0 %v253
    %255 = vmatprep.subr.mxu0 0.0
    %v256 = vand.u32 %v156, 4294901760
    %257 = vmatpush1.msra.mxu0 %v256
    %258 = vmatprep.subr.mxu0 0.0
    %v259 = vand.u32 %v157, 4294901760
    %260 = vmatpush1.msra.mxu0 %v259
    %261 = vmatprep.subr.mxu0 0.0
    %v262 = vand.u32 %v158, 4294901760
    %263 = vmatpush1.msra.mxu0 %v262
    %264 = vmatprep.subr.mxu0 0.0
    %v265 = vand.u32 %v159, 4294901760
    %266 = vmatpush1.msra.mxu0 %v265
    %267 = vmatprep.subr.mxu0 0.0
    %v268 = vand.u32 %v160, 4294901760
    %269 = vmatpush1.msra.mxu0 %v268
    %270 = vmatprep.subr.mxu0 0.0
    %v271 = vand.u32 %v161, 4294901760
    %272 = vmatpush1.msra.mxu0 %v271
    %273 = vmatprep.subr.mxu0 0.0
    %v274 = vand.u32 %v162, 4294901760
    %275 = vmatpush1.msra.mxu0 %v274
    %276 = vmatprep.subr.mxu0 0.0
    %v277 = vand.u32 %v163, 4294901760
    %278 = vmatpush1.msra.mxu0 %v277
    %279 = vmatprep.subr.mxu0 0.0
    %v280 = vand.u32 %v164, 4294901760
    %281 = vmatpush1.msra.mxu0 %v280
    %282 = vmatprep.subr.mxu0 0.0
    %v283 = vand.u32 %v165, 4294901760
    %284 = vmatpush1.msra.mxu0 %v283
    %v285 = vand.u32 %v43, 4294901760
    %v286 = vsub.f32 %v43, %v285
    %v287 = vand.u32 %v286, 4294901760
    %v288 = vsub.f32 %v286, %v287
    %v289 = vand.u32 %v288, 4294901760
    %290 = vmatprep.mubr.f32.mxu0 %v289
    %v291 = vand.u32 %v113, 4294901760
    %v292 = vsub.f32 %v113, %v291
    %v293 = vand.u32 %v292, 4294901760
    %v294 = vsub.f32 %v292, %v293
    %v295 = vand.u32 %v294, 4294901760
    %296 = vmatmul.mubr.f32.gmra.mrb[0].mxu0 %v295
    %v297 = vpop.f32.mrb[0].mxu0
    %v298 = vadd.f32 %v187, %v297
    %v299 = vpop.f32.mrb[0].mxu0
    %v300 = vand.u32 %v44, 4294901760
    %v301 = vsub.f32 %v44, %v300
    %v302 = vand.u32 %v301, 4294901760
    %v303 = vsub.f32 %v301, %v302
    %v304 = vand.u32 %v303, 4294901760
    %305 = vmatprep.mubr.f32.mxu0 %v304
    %v306 = vand.u32 %v114, 4294901760
    %v307 = vsub.f32 %v114, %v306
    %v308 = vand.u32 %v307, 4294901760
    %v309 = vsub.f32 %v307, %v308
    %v310 = vand.u32 %v309, 4294901760
    %311 = vmatmul.mubr.f32.gmra.mrb[0].mxu0 %v310
    %v312 = vpop.f32.mrb[0].mxu0
    %v313 = vadd.f32 %v187, %v312
    %v314 = vpop.f32.mrb[0].mxu0
    %v315 = vand.u32 %v45, 4294901760
    %v316 = vsub.f32 %v45, %v315
    %v317 = vand.u32 %v316, 4294901760
    %v318 = vsub.f32 %v316, %v317
    %v319 = vand.u32 %v318, 4294901760
    %320 = vmatprep.mubr.f32.mxu0 %v319
    %v321 = vand.u32 %v115, 4294901760
    %v322 = vsub.f32 %v115, %v321
    %v323 = vand.u32 %v322, 4294901760
    %v324 = vsub.f32 %v322, %v323
    %v325 = vand.u32 %v324, 4294901760
    %326 = vmatmul.mubr.f32.gmra.mrb[0].mxu0 %v325
    %v327 = vpop.f32.mrb[0].mxu0
    %v328 = vadd.f32 %v187, %v327
    %v329 = vpop.f32.mrb[0].mxu0
    %v330 = vand.u32 %v46, 4294901760
    %v331 = vsub.f32 %v46, %v330
    %v332 = vand.u32 %v331, 4294901760
    %v333 = vsub.f32 %v331, %v332
    %v334 = vand.u32 %v333, 4294901760
    %335 = vmatprep.mubr.f32.mxu0 %v334
    %v336 = vand.u32 %v116, 4294901760
    %v337 = vsub.f32 %v116, %v336
    %v338 = vand.u32 %v337, 4294901760
    %v339 = vsub.f32 %v337, %v338
    %v340 = vand.u32 %v339, 4294901760
    %341 = vmatmul.mubr.f32.gmra.mrb[0].mxu0 %v340
    %v342 = vpop.f32.mrb[0].mxu0
    %v343 = vadd.f32 %v187, %v342
    %v344 = vpop.f32.mrb[0].mxu0
    %345 = vdwg.mxu0
    %346 = vmatprep.subr.mxu0 0.0
    %v347 = vand.u32 %v134, 4294901760
    %v348 = vsub.f32 %v134, %v347
    %v349 = vand.u32 %v348, 4294901760
    %v350 = vsub.f32 %v348, %v349
    %v351 = vand.u32 %v350, 4294901760
    %352 = vmatpush1.msra.mxu0 %v351
    %353 = vmatprep.subr.mxu0 0.0
    %v354 = vand.u32 %v135, 4294901760
    %v355 = vsub.f32 %v135, %v354
    %v356 = vand.u32 %v355, 4294901760
    %v357 = vsub.f32 %v355, %v356
    %v358 = vand.u32 %v357, 4294901760
    %359 = vmatpush1.msra.mxu0 %v358
    %360 = vmatprep.subr.mxu0 0.0
    %v361 = vand.u32 %v136, 4294901760
    %v362 = vsub.f32 %v136, %v361
    %v363 = vand.u32 %v362, 4294901760
    %v364 = vsub.f32 %v362, %v363
    %v365 = vand.u32 %v364, 4294901760
    %366 = vmatpush1.msra.mxu0 %v365
    %367 = vmatprep.subr.mxu0 0.0
    %v368 = vand.u32 %v137, 4294901760
    %v369 = vsub.f32 %v137, %v368
    %v370 = vand.u32 %v369, 4294901760
    %v371 = vsub.f32 %v369, %v370
    %v372 = vand.u32 %v371, 4294901760
    %373 = vmatpush1.msra.mxu0 %v372
    %374 = vmatprep.subr.mxu0 0.0
    %v375 = vand.u32 %v138, 4294901760
    %v376 = vsub.f32 %v138, %v375
    %v377 = vand.u32 %v376, 4294901760
    %v378 = vsub.f32 %v376, %v377
    %v379 = vand.u32 %v378, 4294901760
    %380 = vmatpush1.msra.mxu0 %v379
    %381 = vmatprep.subr.mxu0 0.0
    %v382 = vand.u32 %v139, 4294901760
    %v383 = vsub.f32 %v139, %v382
    %v384 = vand.u32 %v383, 4294901760
    %v385 = vsub.f32 %v383, %v384
    %v386 = vand.u32 %v385, 4294901760
    %387 = vmatpush1.msra.mxu0 %v386
    %388 = vmatprep.subr.mxu0 0.0
    %v389 = vand.u32 %v140, 4294901760
    %v390 = vsub.f32 %v140, %v389
    %v391 = vand.u32 %v390, 4294901760
    %v392 = vsub.f32 %v390, %v391
    %v393 = vand.u32 %v392, 4294901760
    %394 = vmatpush1.msra.mxu0 %v393
    %395 = vmatprep.subr.mxu0 0.0
    %v396 = vand.u32 %v141, 4294901760
    %v397 = vsub.f32 %v141, %v396
    %v398 = vand.u32 %v397, 4294901760
    %v399 = vsub.f32 %v397, %v398
    %v400 = vand.u32 %v399, 4294901760
    %401 = vmatpush1.msra.mxu0 %v400
    %402 = vmatprep.subr.mxu0 0.0
    %v403 = vand.u32 %v142, 4294901760
    %v404 = vsub.f32 %v142, %v403
    %v405 = vand.u32 %v404, 4294901760
    %v406 = vsub.f32 %v404, %v405
    %v407 = vand.u32 %v406, 4294901760
    %408 = vmatpush1.msra.mxu0 %v407
    %409 = vmatprep.subr.mxu0 0.0
    %v410 = vand.u32 %v143, 4294901760
    %v411 = vsub.f32 %v143, %v410
    %v412 = vand.u32 %v411, 4294901760
    %v413 = vsub.f32 %v411, %v412
    %v414 = vand.u32 %v413, 4294901760
    %415 = vmatpush1.msra.mxu0 %v414
    %416 = vmatprep.subr.mxu0 0.0
    %v417 = vand.u32 %v144, 4294901760
    %v418 = vsub.f32 %v144, %v417
    %v419 = vand.u32 %v418, 4294901760
    %v420 = vsub.f32 %v418, %v419
    %v421 = vand.u32 %v420, 4294901760
    %422 = vmatpush1.msra.mxu0 %v421
    %423 = vmatprep.subr.mxu0 0.0
    %v424 = vand.u32 %v145, 4294901760
    %v425 = vsub.f32 %v145, %v424
    %v426 = vand.u32 %v425, 4294901760
    %v427 = vsub.f32 %v425, %v426
    %v428 = vand.u32 %v427, 4294901760
    %429 = vmatpush1.msra.mxu0 %v428
    %430 = vmatprep.subr.mxu0 0.0
    %v431 = vand.u32 %v146, 4294901760
    %v432 = vsub.f32 %v146, %v431
    %v433 = vand.u32 %v432, 4294901760
    %v434 = vsub.f32 %v432, %v433
    %v435 = vand.u32 %v434, 4294901760
    %436 = vmatpush1.msra.mxu0 %v435
    %437 = vmatprep.subr.mxu0 0.0
    %v438 = vand.u32 %v147, 4294901760
    %v439 = vsub.f32 %v147, %v438
    %v440 = vand.u32 %v439, 4294901760
    %v441 = vsub.f32 %v439, %v440
    %v442 = vand.u32 %v441, 4294901760
    %443 = vmatpush1.msra.mxu0 %v442
    %444 = vmatprep.subr.mxu0 0.0
    %v445 = vand.u32 %v148, 4294901760
    %v446 = vsub.f32 %v148, %v445
    %v447 = vand.u32 %v446, 4294901760
    %v448 = vsub.f32 %v446, %v447
    %v449 = vand.u32 %v448, 4294901760
    %450 = vmatpush1.msra.mxu0 %v449
    %451 = vmatprep.subr.mxu0 0.0
    %v452 = vand.u32 %v149, 4294901760
    %v453 = vsub.f32 %v149, %v452
    %v454 = vand.u32 %v453, 4294901760
    %v455 = vsub.f32 %v453, %v454
    %v456 = vand.u32 %v455, 4294901760
    %457 = vmatpush1.msra.mxu0 %v456
    %458 = vmatprep.subr.mxu0 0.0
    %v459 = vand.u32 %v150, 4294901760
    %v460 = vsub.f32 %v150, %v459
    %v461 = vand.u32 %v460, 4294901760
    %v462 = vsub.f32 %v460, %v461
    %v463 = vand.u32 %v462, 4294901760
    %464 = vmatpush1.msra.mxu0 %v463
    %465 = vmatprep.subr.mxu0 0.0
    %v466 = vand.u32 %v151, 4294901760
    %v467 = vsub.f32 %v151, %v466
    %v468 = vand.u32 %v467, 4294901760
    %v469 = vsub.f32 %v467, %v468
    %v470 = vand.u32 %v469, 4294901760
    %471 = vmatpush1.msra.mxu0 %v470
    %472 = vmatprep.subr.mxu0 0.0
    %v473 = vand.u32 %v152, 4294901760
    %v474 = vsub.f32 %v152, %v473
    %v475 = vand.u32 %v474, 4294901760
    %v476 = vsub.f32 %v474, %v475
    %v477 = vand.u32 %v476, 4294901760
    %478 = vmatpush1.msra.mxu0 %v477
    %479 = vmatprep.subr.mxu0 0.0
    %v480 = vand.u32 %v153, 4294901760
    %v481 = vsub.f32 %v153, %v480
    %v482 = vand.u32 %v481, 4294901760
    %v483 = vsub.f32 %v481, %v482
    %v484 = vand.u32 %v483, 4294901760
    %485 = vmatpush1.msra.mxu0 %v484
    %486 = vmatprep.subr.mxu0 0.0
    %v487 = vand.u32 %v154, 4294901760
    %v488 = vsub.f32 %v154, %v487
    %v489 = vand.u32 %v488, 4294901760
    %v490 = vsub.f32 %v488, %v489
    %v491 = vand.u32 %v490, 4294901760
    %492 = vmatpush1.msra.mxu0 %v491
    %493 = vmatprep.subr.mxu0 0.0
    %v494 = vand.u32 %v155, 4294901760
    %v495 = vsub.f32 %v155, %v494
    %v496 = vand.u32 %v495, 4294901760
    %v497 = vsub.f32 %v495, %v496
    %v498 = vand.u32 %v497, 4294901760
    %499 = vmatpush1.msra.mxu0 %v498
    %500 = vmatprep.subr.mxu0 0.0
    %v501 = vand.u32 %v156, 4294901760
    %v502 = vsub.f32 %v156, %v501
    %v503 = vand.u32 %v502, 4294901760
    %v504 = vsub.f32 %v502, %v503
    %v505 = vand.u32 %v504, 4294901760
    %506 = vmatpush1.msra.mxu0 %v505
    %507 = vmatprep.subr.mxu0 0.0
    %v508 = vand.u32 %v157, 4294901760
    %v509 = vsub.f32 %v157, %v508
    %v510 = vand.u32 %v509, 4294901760
    %v511 = vsub.f32 %v509, %v510
    %v512 = vand.u32 %v511, 4294901760
    %513 = vmatpush1.msra.mxu0 %v512
    %514 = vmatprep.subr.mxu0 0.0
    %v515 = vand.u32 %v158, 4294901760
    %v516 = vsub.f32 %v158, %v515
    %v517 = vand.u32 %v516, 4294901760
    %v518 = vsub.f32 %v516, %v517
    %v519 = vand.u32 %v518, 4294901760
    %520 = vmatpush1.msra.mxu0 %v519
    %521 = vmatprep.subr.mxu0 0.0
    %v522 = vand.u32 %v159, 4294901760
    %v523 = vsub.f32 %v159, %v522
    %v524 = vand.u32 %v523, 4294901760
    %v525 = vsub.f32 %v523, %v524
    %v526 = vand.u32 %v525, 4294901760
    %527 = vmatpush1.msra.mxu0 %v526
    %528 = vmatprep.subr.mxu0 0.0
    %v529 = vand.u32 %v160, 4294901760
    %v530 = vsub.f32 %v160, %v529
    %v531 = vand.u32 %v530, 4294901760
    %v532 = vsub.f32 %v530, %v531
    %v533 = vand.u32 %v532, 4294901760
    %534 = vmatpush1.msra.mxu0 %v533
    %535 = vmatprep.subr.mxu0 0.0
    %v536 = vand.u32 %v161, 4294901760
    %v537 = vsub.f32 %v161, %v536
    %v538 = vand.u32 %v537, 4294901760
    %v539 = vsub.f32 %v537, %v538
    %v540 = vand.u32 %v539, 4294901760
    %541 = vmatpush1.msra.mxu0 %v540
    %542 = vmatprep.subr.mxu0 0.0
    %v543 = vand.u32 %v162, 4294901760
    %v544 = vsub.f32 %v162, %v543
    %v545 = vand.u32 %v544, 4294901760
    %v546 = vsub.f32 %v544, %v545
    %v547 = vand.u32 %v546, 4294901760
    %548 = vmatpush1.msra.mxu0 %v547
    %549 = vmatprep.subr.mxu0 0.0
    %v550 = vand.u32 %v163, 4294901760
    %v551 = vsub.f32 %v163, %v550
    %v552 = vand.u32 %v551, 4294901760
    %v553 = vsub.f32 %v551, %v552
    %v554 = vand.u32 %v553, 4294901760
    %555 = vmatpush1.msra.mxu0 %v554
    %556 = vmatprep.subr.mxu0 0.0
    %v557 = vand.u32 %v164, 4294901760
    %v558 = vsub.f32 %v164, %v557
    %v559 = vand.u32 %v558, 4294901760
    %v560 = vsub.f32 %v558, %v559
    %v561 = vand.u32 %v560, 4294901760
    %562 = vmatpush1.msra.mxu0 %v561
    %563 = vmatprep.subr.mxu0 0.0
    %v564 = vand.u32 %v165, 4294901760
    %v565 = vsub.f32 %v165, %v564
    %v566 = vand.u32 %v565, 4294901760
    %v567 = vsub.f32 %v565, %v566
    %v568 = vand.u32 %v567, 4294901760
    %569 = vmatpush1.msra.mxu0 %v568
    %v570 = vand.u32 %v43, 4294901760
    %571 = vmatprep.mubr.f32.mxu0 %v570
    %v572 = vand.u32 %v113, 4294901760
    %573 = vmatmul.mubr.f32.gmra.mrb[0].mxu0 %v572
    %v574 = vpop.f32.mrb[0].mxu0
    %v575 = vadd.f32 %v298, %v574
    %v576 = vpop.f32.mrb[0].mxu0
    %v577 = vand.u32 %v44, 4294901760
    %578 = vmatprep.mubr.f32.mxu0 %v577
    %v579 = vand.u32 %v114, 4294901760
    %580 = vmatmul.mubr.f32.gmra.mrb[0].mxu0 %v579
    %v581 = vpop.f32.mrb[0].mxu0
    %v582 = vadd.f32 %v313, %v581
    %v583 = vpop.f32.mrb[0].mxu0
    %v584 = vand.u32 %v45, 4294901760
    %585 = vmatprep.mubr.f32.mxu0 %v584
    %v586 = vand.u32 %v115, 4294901760
    %587 = vmatmul.mubr.f32.gmra.mrb[0].mxu0 %v586
    %v588 = vpop.f32.mrb[0].mxu0
    %v589 = vadd.f32 %v328, %v588
    %v590 = vpop.f32.mrb[0].mxu0
    %v591 = vand.u32 %v46, 4294901760
    %592 = vmatprep.mubr.f32.mxu0 %v591
    %v593 = vand.u32 %v116, 4294901760
    %594 = vmatmul.mubr.f32.gmra.mrb[0].mxu0 %v593
    %v595 = vpop.f32.mrb[0].mxu0
    %v596 = vadd.f32 %v343, %v595
    %v597 = vpop.f32.mrb[0].mxu0
    %598 = vdwg.mxu0
    %599 = vmatprep.subr.mxu0 0.0
    %v600 = vand.u32 %v134, 4294901760
    %v601 = vsub.f32 %v134, %v600
    %602 = vmatpush1.msra.mxu0 %v601
    %603 = vmatprep.subr.mxu0 0.0
    %v604 = vand.u32 %v135, 4294901760
    %v605 = vsub.f32 %v135, %v604
    %606 = vmatpush1.msra.mxu0 %v605
    %607 = vmatprep.subr.mxu0 0.0
    %v608 = vand.u32 %v136, 4294901760
    %v609 = vsub.f32 %v136, %v608
    %610 = vmatpush1.msra.mxu0 %v609
    %611 = vmatprep.subr.mxu0 0.0
    %v612 = vand.u32 %v137, 4294901760
    %v613 = vsub.f32 %v137, %v612
    %614 = vmatpush1.msra.mxu0 %v613
    %615 = vmatprep.subr.mxu0 0.0
    %v616 = vand.u32 %v138, 4294901760
    %v617 = vsub.f32 %v138, %v616
    %618 = vmatpush1.msra.mxu0 %v617
    %619 = vmatprep.subr.mxu0 0.0
    %v620 = vand.u32 %v139, 4294901760
    %v621 = vsub.f32 %v139, %v620
    %622 = vmatpush1.msra.mxu0 %v621
    %623 = vmatprep.subr.mxu0 0.0
    %v624 = vand.u32 %v140, 4294901760
    %v625 = vsub.f32 %v140, %v624
    %626 = vmatpush1.msra.mxu0 %v625
    %627 = vmatprep.subr.mxu0 0.0
    %v628 = vand.u32 %v141, 4294901760
    %v629 = vsub.f32 %v141, %v628
    %630 = vmatpush1.msra.mxu0 %v629
    %631 = vmatprep.subr.mxu0 0.0
    %v632 = vand.u32 %v142, 4294901760
    %v633 = vsub.f32 %v142, %v632
    %634 = vmatpush1.msra.mxu0 %v633
    %635 = vmatprep.subr.mxu0 0.0
    %v636 = vand.u32 %v143, 4294901760
    %v637 = vsub.f32 %v143, %v636
    %638 = vmatpush1.msra.mxu0 %v637
    %639 = vmatprep.subr.mxu0 0.0
    %v640 = vand.u32 %v144, 4294901760
    %v641 = vsub.f32 %v144, %v640
    %642 = vmatpush1.msra.mxu0 %v641
    %643 = vmatprep.subr.mxu0 0.0
    %v644 = vand.u32 %v145, 4294901760
    %v645 = vsub.f32 %v145, %v644
    %646 = vmatpush1.msra.mxu0 %v645
    %647 = vmatprep.subr.mxu0 0.0
    %v648 = vand.u32 %v146, 4294901760
    %v649 = vsub.f32 %v146, %v648
    %650 = vmatpush1.msra.mxu0 %v649
    %651 = vmatprep.subr.mxu0 0.0
    %v652 = vand.u32 %v147, 4294901760
    %v653 = vsub.f32 %v147, %v652
    %654 = vmatpush1.msra.mxu0 %v653
    %655 = vmatprep.subr.mxu0 0.0
    %v656 = vand.u32 %v148, 4294901760
    %v657 = vsub.f32 %v148, %v656
    %658 = vmatpush1.msra.mxu0 %v657
    %659 = vmatprep.subr.mxu0 0.0
    %v660 = vand.u32 %v149, 4294901760
    %v661 = vsub.f32 %v149, %v660
    %662 = vmatpush1.msra.mxu0 %v661
    %663 = vmatprep.subr.mxu0 0.0
    %v664 = vand.u32 %v150, 4294901760
    %v665 = vsub.f32 %v150, %v664
    %666 = vmatpush1.msra.mxu0 %v665
    %667 = vmatprep.subr.mxu0 0.0
    %v668 = vand.u32 %v151, 4294901760
    %v669 = vsub.f32 %v151, %v668
    %670 = vmatpush1.msra.mxu0 %v669
    %671 = vmatprep.subr.mxu0 0.0
    %v672 = vand.u32 %v152, 4294901760
    %v673 = vsub.f32 %v152, %v672
    %674 = vmatpush1.msra.mxu0 %v673
    %675 = vmatprep.subr.mxu0 0.0
    %v676 = vand.u32 %v153, 4294901760
    %v677 = vsub.f32 %v153, %v676
    %678 = vmatpush1.msra.mxu0 %v677
    %679 = vmatprep.subr.mxu0 0.0
    %v680 = vand.u32 %v154, 4294901760
    %v681 = vsub.f32 %v154, %v680
    %682 = vmatpush1.msra.mxu0 %v681
    %683 = vmatprep.subr.mxu0 0.0
    %v684 = vand.u32 %v155, 4294901760
    %v685 = vsub.f32 %v155, %v684
    %686 = vmatpush1.msra.mxu0 %v685
    %687 = vmatprep.subr.mxu0 0.0
    %v688 = vand.u32 %v156, 4294901760
    %v689 = vsub.f32 %v156, %v688
    %690 = vmatpush1.msra.mxu0 %v689
    %691 = vmatprep.subr.mxu0 0.0
    %v692 = vand.u32 %v157, 4294901760
    %v693 = vsub.f32 %v157, %v692
    %694 = vmatpush1.msra.mxu0 %v693
    %695 = vmatprep.subr.mxu0 0.0
    %v696 = vand.u32 %v158, 4294901760
    %v697 = vsub.f32 %v158, %v696
    %698 = vmatpush1.msra.mxu0 %v697
    %699 = vmatprep.subr.mxu0 0.0
    %v700 = vand.u32 %v159, 4294901760
    %v701 = vsub.f32 %v159, %v700
    %702 = vmatpush1.msra.mxu0 %v701
    %703 = vmatprep.subr.mxu0 0.0
    %v704 = vand.u32 %v160, 4294901760
    %v705 = vsub.f32 %v160, %v704
    %706 = vmatpush1.msra.mxu0 %v705
    %707 = vmatprep.subr.mxu0 0.0
    %v708 = vand.u32 %v161, 4294901760
    %v709 = vsub.f32 %v161, %v708
    %710 = vmatpush1.msra.mxu0 %v709
    %711 = vmatprep.subr.mxu0 0.0
    %v712 = vand.u32 %v162, 4294901760
    %v713 = vsub.f32 %v162, %v712
    %714 = vmatpush1.msra.mxu0 %v713
    %715 = vmatprep.subr.mxu0 0.0
    %v716 = vand.u32 %v163, 4294901760
    %v717 = vsub.f32 %v163, %v716
    %718 = vmatpush1.msra.mxu0 %v717
    %719 = vmatprep.subr.mxu0 0.0
    %v720 = vand.u32 %v164, 4294901760
    %v721 = vsub.f32 %v164, %v720
    %722 = vmatpush1.msra.mxu0 %v721
    %723 = vmatprep.subr.mxu0 0.0
    %v724 = vand.u32 %v165, 4294901760
    %v725 = vsub.f32 %v165, %v724
    %726 = vmatpush1.msra.mxu0 %v725
    %v727 = vand.u32 %v43, 4294901760
    %v728 = vsub.f32 %v43, %v727
    %729 = vmatprep.mubr.f32.mxu0 %v728
    %v730 = vand.u32 %v113, 4294901760
    %v731 = vsub.f32 %v113, %v730
    %732 = vmatmul.mubr.f32.gmra.mrb[0].mxu0 %v731
    %v733 = vpop.f32.mrb[0].mxu0
    %v734 = vadd.f32 %v575, %v733
    %v735 = vpop.f32.mrb[0].mxu0
    %v736 = vand.u32 %v44, 4294901760
    %v737 = vsub.f32 %v44, %v736
    %738 = vmatprep.mubr.f32.mxu0 %v737
    %v739 = vand.u32 %v114, 4294901760
    %v740 = vsub.f32 %v114, %v739
    %741 = vmatmul.mubr.f32.gmra.mrb[0].mxu0 %v740
    %v742 = vpop.f32.mrb[0].mxu0
    %v743 = vadd.f32 %v582, %v742
    %v744 = vpop.f32.mrb[0].mxu0
    %v745 = vand.u32 %v45, 4294901760
    %v746 = vsub.f32 %v45, %v745
    %747 = vmatprep.mubr.f32.mxu0 %v746
    %v748 = vand.u32 %v115, 4294901760
    %v749 = vsub.f32 %v115, %v748
    %750 = vmatmul.mubr.f32.gmra.mrb[0].mxu0 %v749
    %v751 = vpop.f32.mrb[0].mxu0
    %v752 = vadd.f32 %v589, %v751
    %v753 = vpop.f32.mrb[0].mxu0
    %v754 = vand.u32 %v46, 4294901760
    %v755 = vsub.f32 %v46, %v754
    %756 = vmatprep.mubr.f32.mxu0 %v755
    %v757 = vand.u32 %v116, 4294901760
    %v758 = vsub.f32 %v116, %v757
    %759 = vmatmul.mubr.f32.gmra.mrb[0].mxu0 %v758
    %v760 = vpop.f32.mrb[0].mxu0
    %v761 = vadd.f32 %v596, %v760
    %v762 = vpop.f32.mrb[0].mxu0
    %763 = vdwg.mxu0
    %764 = vmatprep.subr.mxu0 0.0
    %v765 = vand.u32 %v134, 4294901760
    %766 = vmatpush1.msra.mxu0 %v765
    %767 = vmatprep.subr.mxu0 0.0
    %v768 = vand.u32 %v135, 4294901760
    %769 = vmatpush1.msra.mxu0 %v768
    %770 = vmatprep.subr.mxu0 0.0
    %v771 = vand.u32 %v136, 4294901760
    %772 = vmatpush1.msra.mxu0 %v771
    %773 = vmatprep.subr.mxu0 0.0
    %v774 = vand.u32 %v137, 4294901760
    %775 = vmatpush1.msra.mxu0 %v774
    %776 = vmatprep.subr.mxu0 0.0
    %v777 = vand.u32 %v138, 4294901760
    %778 = vmatpush1.msra.mxu0 %v777
    %779 = vmatprep.subr.mxu0 0.0
    %v780 = vand.u32 %v139, 4294901760
    %781 = vmatpush1.msra.mxu0 %v780
    %782 = vmatprep.subr.mxu0 0.0
    %v783 = vand.u32 %v140, 4294901760
    %784 = vmatpush1.msra.mxu0 %v783
    %785 = vmatprep.subr.mxu0 0.0
    %v786 = vand.u32 %v141, 4294901760
    %787 = vmatpush1.msra.mxu0 %v786
    %788 = vmatprep.subr.mxu0 0.0
    %v789 = vand.u32 %v142, 4294901760
    %790 = vmatpush1.msra.mxu0 %v789
    %791 = vmatprep.subr.mxu0 0.0
    %v792 = vand.u32 %v143, 4294901760
    %793 = vmatpush1.msra.mxu0 %v792
    %794 = vmatprep.subr.mxu0 0.0
    %v795 = vand.u32 %v144, 4294901760
    %796 = vmatpush1.msra.mxu0 %v795
    %797 = vmatprep.subr.mxu0 0.0
    %v798 = vand.u32 %v145, 4294901760
    %799 = vmatpush1.msra.mxu0 %v798
    %800 = vmatprep.subr.mxu0 0.0
    %v801 = vand.u32 %v146, 4294901760
    %802 = vmatpush1.msra.mxu0 %v801
    %803 = vmatprep.subr.mxu0 0.0
    %v804 = vand.u32 %v147, 4294901760
    %805 = vmatpush1.msra.mxu0 %v804
    %806 = vmatprep.subr.mxu0 0.0
    %v807 = vand.u32 %v148, 4294901760
    %808 = vmatpush1.msra.mxu0 %v807
    %809 = vmatprep.subr.mxu0 0.0
    %v810 = vand.u32 %v149, 4294901760
    %811 = vmatpush1.msra.mxu0 %v810
    %812 = vmatprep.subr.mxu0 0.0
    %v813 = vand.u32 %v150, 4294901760
    %814 = vmatpush1.msra.mxu0 %v813
    %815 = vmatprep.subr.mxu0 0.0
    %v816 = vand.u32 %v151, 4294901760
    %817 = vmatpush1.msra.mxu0 %v816
    %818 = vmatprep.subr.mxu0 0.0
    %v819 = vand.u32 %v152, 4294901760
    %820 = vmatpush1.msra.mxu0 %v819
    %821 = vmatprep.subr.mxu0 0.0
    %v822 = vand.u32 %v153, 4294901760
    %823 = vmatpush1.msra.mxu0 %v822
    %824 = vmatprep.subr.mxu0 0.0
    %v825 = vand.u32 %v154, 4294901760
    %826 = vmatpush1.msra.mxu0 %v825
    %827 = vmatprep.subr.mxu0 0.0
    %v828 = vand.u32 %v155, 4294901760
    %829 = vmatpush1.msra.mxu0 %v828
    %830 = vmatprep.subr.mxu0 0.0
    %v831 = vand.u32 %v156, 4294901760
    %832 = vmatpush1.msra.mxu0 %v831
    %833 = vmatprep.subr.mxu0 0.0
    %v834 = vand.u32 %v157, 4294901760
    %835 = vmatpush1.msra.mxu0 %v834
    %836 = vmatprep.subr.mxu0 0.0
    %v837 = vand.u32 %v158, 4294901760
    %838 = vmatpush1.msra.mxu0 %v837
    %839 = vmatprep.subr.mxu0 0.0
    %v840 = vand.u32 %v159, 4294901760
    %841 = vmatpush1.msra.mxu0 %v840
    %842 = vmatprep.subr.mxu0 0.0
    %v843 = vand.u32 %v160, 4294901760
    %844 = vmatpush1.msra.mxu0 %v843
    %845 = vmatprep.subr.mxu0 0.0
    %v846 = vand.u32 %v161, 4294901760
    %847 = vmatpush1.msra.mxu0 %v846
    %848 = vmatprep.subr.mxu0 0.0
    %v849 = vand.u32 %v162, 4294901760
    %850 = vmatpush1.msra.mxu0 %v849
    %851 = vmatprep.subr.mxu0 0.0
    %v852 = vand.u32 %v163, 4294901760
    %853 = vmatpush1.msra.mxu0 %v852
    %854 = vmatprep.subr.mxu0 0.0
    %v855 = vand.u32 %v164, 4294901760
    %856 = vmatpush1.msra.mxu0 %v855
    %857 = vmatprep.subr.mxu0 0.0
    %v858 = vand.u32 %v165, 4294901760
    %859 = vmatpush1.msra.mxu0 %v858
    %v860 = vand.u32 %v43, 4294901760
    %v861 = vsub.f32 %v43, %v860
    %v862 = vand.u32 %v861, 4294901760
    %863 = vmatprep.mubr.f32.mxu0 %v862
    %v864 = vand.u32 %v113, 4294901760
    %v865 = vsub.f32 %v113, %v864
    %v866 = vand.u32 %v865, 4294901760
    %867 = vmatmul.mubr.f32.gmra.mrb[0].mxu0 %v866
    %v868 = vpop.f32.mrb[0].mxu0
    %v869 = vadd.f32 %v734, %v868
    %v870 = vpop.f32.mrb[0].mxu0
    %v871 = vand.u32 %v44, 4294901760
    %v872 = vsub.f32 %v44, %v871
    %v873 = vand.u32 %v872, 4294901760
    %874 = vmatprep.mubr.f32.mxu0 %v873
    %v875 = vand.u32 %v114, 4294901760
    %v876 = vsub.f32 %v114, %v875
    %v877 = vand.u32 %v876, 4294901760
    %878 = vmatmul.mubr.f32.gmra.mrb[0].mxu0 %v877
    %v879 = vpop.f32.mrb[0].mxu0
    %v880 = vadd.f32 %v743, %v879
    %v881 = vpop.f32.mrb[0].mxu0
    %v882 = vand.u32 %v45, 4294901760
    %v883 = vsub.f32 %v45, %v882
    %v884 = vand.u32 %v883, 4294901760
    %885 = vmatprep.mubr.f32.mxu0 %v884
    %v886 = vand.u32 %v115, 4294901760
    %v887 = vsub.f32 %v115, %v886
    %v888 = vand.u32 %v887, 4294901760
    %889 = vmatmul.mubr.f32.gmra.mrb[0].mxu0 %v888
    %v890 = vpop.f32.mrb[0].mxu0
    %v891 = vadd.f32 %v752, %v890
    %v892 = vpop.f32.mrb[0].mxu0
    %v893 = vand.u32 %v46, 4294901760
    %v894 = vsub.f32 %v46, %v893
    %v895 = vand.u32 %v894, 4294901760
    %896 = vmatprep.mubr.f32.mxu0 %v895
    %v897 = vand.u32 %v116, 4294901760
    %v898 = vsub.f32 %v116, %v897
    %v899 = vand.u32 %v898, 4294901760
    %900 = vmatmul.mubr.f32.gmra.mrb[0].mxu0 %v899
    %v901 = vpop.f32.mrb[0].mxu0
    %v902 = vadd.f32 %v761, %v901
    %v903 = vpop.f32.mrb[0].mxu0
    %904 = vdwg.mxu0
    %905 = vmatprep.subr.mxu0 0.0
    %v906 = vand.u32 %v134, 4294901760
    %v907 = vsub.f32 %v134, %v906
    %v908 = vand.u32 %v907, 4294901760
    %909 = vmatpush1.msra.mxu0 %v908
    %910 = vmatprep.subr.mxu0 0.0
    %v911 = vand.u32 %v135, 4294901760
    %v912 = vsub.f32 %v135, %v911
    %v913 = vand.u32 %v912, 4294901760
    %914 = vmatpush1.msra.mxu0 %v913
    %915 = vmatprep.subr.mxu0 0.0
    %v916 = vand.u32 %v136, 4294901760
    %v917 = vsub.f32 %v136, %v916
    %v918 = vand.u32 %v917, 4294901760
    %919 = vmatpush1.msra.mxu0 %v918
    %920 = vmatprep.subr.mxu0 0.0
    %v921 = vand.u32 %v137, 4294901760
    %v922 = vsub.f32 %v137, %v921
    %v923 = vand.u32 %v922, 4294901760
    %924 = vmatpush1.msra.mxu0 %v923
    %925 = vmatprep.subr.mxu0 0.0
    %v926 = vand.u32 %v138, 4294901760
    %v927 = vsub.f32 %v138, %v926
    %v928 = vand.u32 %v927, 4294901760
    %929 = vmatpush1.msra.mxu0 %v928
    %930 = vmatprep.subr.mxu0 0.0
    %v931 = vand.u32 %v139, 4294901760
    %v932 = vsub.f32 %v139, %v931
    %v933 = vand.u32 %v932, 4294901760
    %934 = vmatpush1.msra.mxu0 %v933
    %935 = vmatprep.subr.mxu0 0.0
    %v936 = vand.u32 %v140, 4294901760
    %v937 = vsub.f32 %v140, %v936
    %v938 = vand.u32 %v937, 4294901760
    %939 = vmatpush1.msra.mxu0 %v938
    %940 = vmatprep.subr.mxu0 0.0
    %v941 = vand.u32 %v141, 4294901760
    %v942 = vsub.f32 %v141, %v941
    %v943 = vand.u32 %v942, 4294901760
    %944 = vmatpush1.msra.mxu0 %v943
    %945 = vmatprep.subr.mxu0 0.0
    %v946 = vand.u32 %v142, 4294901760
    %v947 = vsub.f32 %v142, %v946
    %v948 = vand.u32 %v947, 4294901760
    %949 = vmatpush1.msra.mxu0 %v948
    %950 = vmatprep.subr.mxu0 0.0
    %v951 = vand.u32 %v143, 4294901760
    %v952 = vsub.f32 %v143, %v951
    %v953 = vand.u32 %v952, 4294901760
    %954 = vmatpush1.msra.mxu0 %v953
    %955 = vmatprep.subr.mxu0 0.0
    %v956 = vand.u32 %v144, 4294901760
    %v957 = vsub.f32 %v144, %v956
    %v958 = vand.u32 %v957, 4294901760
    %959 = vmatpush1.msra.mxu0 %v958
    %960 = vmatprep.subr.mxu0 0.0
    %v961 = vand.u32 %v145, 4294901760
    %v962 = vsub.f32 %v145, %v961
    %v963 = vand.u32 %v962, 4294901760
    %964 = vmatpush1.msra.mxu0 %v963
    %965 = vmatprep.subr.mxu0 0.0
    %v966 = vand.u32 %v146, 4294901760
    %v967 = vsub.f32 %v146, %v966
    %v968 = vand.u32 %v967, 4294901760
    %969 = vmatpush1.msra.mxu0 %v968
    %970 = vmatprep.subr.mxu0 0.0
    %v971 = vand.u32 %v147, 4294901760
    %v972 = vsub.f32 %v147, %v971
    %v973 = vand.u32 %v972, 4294901760
    %974 = vmatpush1.msra.mxu0 %v973
    %975 = vmatprep.subr.mxu0 0.0
    %v976 = vand.u32 %v148, 4294901760
    %v977 = vsub.f32 %v148, %v976
    %v978 = vand.u32 %v977, 4294901760
    %979 = vmatpush1.msra.mxu0 %v978
    %980 = vmatprep.subr.mxu0 0.0
    %v981 = vand.u32 %v149, 4294901760
    %v982 = vsub.f32 %v149, %v981
    %v983 = vand.u32 %v982, 4294901760
    %984 = vmatpush1.msra.mxu0 %v983
    %985 = vmatprep.subr.mxu0 0.0
    %v986 = vand.u32 %v150, 4294901760
    %v987 = vsub.f32 %v150, %v986
    %v988 = vand.u32 %v987, 4294901760
    %989 = vmatpush1.msra.mxu0 %v988
    %990 = vmatprep.subr.mxu0 0.0
    %v991 = vand.u32 %v151, 4294901760
    %v992 = vsub.f32 %v151, %v991
    %v993 = vand.u32 %v992, 4294901760
    %994 = vmatpush1.msra.mxu0 %v993
    %995 = vmatprep.subr.mxu0 0.0
    %v996 = vand.u32 %v152, 4294901760
    %v997 = vsub.f32 %v152, %v996
    %v998 = vand.u32 %v997, 4294901760
    %999 = vmatpush1.msra.mxu0 %v998
    %1000 = vmatprep.subr.mxu0 0.0
    %v1001 = vand.u32 %v153, 4294901760
    %v1002 = vsub.f32 %v153, %v1001
    %v1003 = vand.u32 %v1002, 4294901760
    %1004 = vmatpush1.msra.mxu0 %v1003
    %1005 = vmatprep.subr.mxu0 0.0
    %v1006 = vand.u32 %v154, 4294901760
    %v1007 = vsub.f32 %v154, %v1006
    %v1008 = vand.u32 %v1007, 4294901760
    %1009 = vmatpush1.msra.mxu0 %v1008
    %1010 = vmatprep.subr.mxu0 0.0
    %v1011 = vand.u32 %v155, 4294901760
    %v1012 = vsub.f32 %v155, %v1011
    %v1013 = vand.u32 %v1012, 4294901760
    %1014 = vmatpush1.msra.mxu0 %v1013
    %1015 = vmatprep.subr.mxu0 0.0
    %v1016 = vand.u32 %v156, 4294901760
    %v1017 = vsub.f32 %v156, %v1016
    %v1018 = vand.u32 %v1017, 4294901760
    %1019 = vmatpush1.msra.mxu0 %v1018
    %1020 = vmatprep.subr.mxu0 0.0
    %v1021 = vand.u32 %v157, 4294901760
    %v1022 = vsub.f32 %v157, %v1021
    %v1023 = vand.u32 %v1022, 4294901760
    %1024 = vmatpush1.msra.mxu0 %v1023
    %1025 = vmatprep.subr.mxu0 0.0
    %v1026 = vand.u32 %v158, 4294901760
    %v1027 = vsub.f32 %v158, %v1026
    %v1028 = vand.u32 %v1027, 4294901760
    %1029 = vmatpush1.msra.mxu0 %v1028
    %1030 = vmatprep.subr.mxu0 0.0
    %v1031 = vand.u32 %v159, 4294901760
    %v1032 = vsub.f32 %v159, %v1031
    %v1033 = vand.u32 %v1032, 4294901760
    %1034 = vmatpush1.msra.mxu0 %v1033
    %1035 = vmatprep.subr.mxu0 0.0
    %v1036 = vand.u32 %v160, 4294901760
    %v1037 = vsub.f32 %v160, %v1036
    %v1038 = vand.u32 %v1037, 4294901760
    %1039 = vmatpush1.msra.mxu0 %v1038
    %1040 = vmatprep.subr.mxu0 0.0
    %v1041 = vand.u32 %v161, 4294901760
    %v1042 = vsub.f32 %v161, %v1041
    %v1043 = vand.u32 %v1042, 4294901760
    %1044 = vmatpush1.msra.mxu0 %v1043
    %1045 = vmatprep.subr.mxu0 0.0
    %v1046 = vand.u32 %v162, 4294901760
    %v1047 = vsub.f32 %v162, %v1046
    %v1048 = vand.u32 %v1047, 4294901760
    %1049 = vmatpush1.msra.mxu0 %v1048
    %1050 = vmatprep.subr.mxu0 0.0
    %v1051 = vand.u32 %v163, 4294901760
    %v1052 = vsub.f32 %v163, %v1051
    %v1053 = vand.u32 %v1052, 4294901760
    %1054 = vmatpush1.msra.mxu0 %v1053
    %1055 = vmatprep.subr.mxu0 0.0
    %v1056 = vand.u32 %v164, 4294901760
    %v1057 = vsub.f32 %v164, %v1056
    %v1058 = vand.u32 %v1057, 4294901760
    %1059 = vmatpush1.msra.mxu0 %v1058
    %1060 = vmatprep.subr.mxu0 0.0
    %v1061 = vand.u32 %v165, 4294901760
    %v1062 = vsub.f32 %v165, %v1061
    %v1063 = vand.u32 %v1062, 4294901760
    %1064 = vmatpush1.msra.mxu0 %v1063
    %v1065 = vand.u32 %v43, 4294901760
    %1066 = vmatprep.mubr.f32.mxu0 %v1065
    %v1067 = vand.u32 %v113, 4294901760
    %1068 = vmatmul.mubr.f32.gmra.mrb[0].mxu0 %v1067
    %v1069 = vpop.f32.mrb[0].mxu0
    %v1070 = vadd.f32 %v869, %v1069
    %v1071 = vpop.f32.mrb[0].mxu0
    %v1072 = vand.u32 %v44, 4294901760
    %1073 = vmatprep.mubr.f32.mxu0 %v1072
    %v1074 = vand.u32 %v114, 4294901760
    %1075 = vmatmul.mubr.f32.gmra.mrb[0].mxu0 %v1074
    %v1076 = vpop.f32.mrb[0].mxu0
    %v1077 = vadd.f32 %v880, %v1076
    %v1078 = vpop.f32.mrb[0].mxu0
    %v1079 = vand.u32 %v45, 4294901760
    %1080 = vmatprep.mubr.f32.mxu0 %v1079
    %v1081 = vand.u32 %v115, 4294901760
    %1082 = vmatmul.mubr.f32.gmra.mrb[0].mxu0 %v1081
    %v1083 = vpop.f32.mrb[0].mxu0
    %v1084 = vadd.f32 %v891, %v1083
    %v1085 = vpop.f32.mrb[0].mxu0
    %v1086 = vand.u32 %v46, 4294901760
    %1087 = vmatprep.mubr.f32.mxu0 %v1086
    %v1088 = vand.u32 %v116, 4294901760
    %1089 = vmatmul.mubr.f32.gmra.mrb[0].mxu0 %v1088
    %v1090 = vpop.f32.mrb[0].mxu0
    %v1091 = vadd.f32 %v902, %v1090
    %v1092 = vpop.f32.mrb[0].mxu0
    %1093 = vdwg.mxu0
    %1094 = vmatprep.subr.mxu0 0.0
    %v1095 = vand.u32 %v134, 4294901760
    %1096 = vmatpush1.msra.mxu0 %v1095
    %1097 = vmatprep.subr.mxu0 0.0
    %v1098 = vand.u32 %v135, 4294901760
    %1099 = vmatpush1.msra.mxu0 %v1098
    %1100 = vmatprep.subr.mxu0 0.0
    %v1101 = vand.u32 %v136, 4294901760
    %1102 = vmatpush1.msra.mxu0 %v1101
    %1103 = vmatprep.subr.mxu0 0.0
    %v1104 = vand.u32 %v137, 4294901760
    %1105 = vmatpush1.msra.mxu0 %v1104
    %1106 = vmatprep.subr.mxu0 0.0
    %v1107 = vand.u32 %v138, 4294901760
    %1108 = vmatpush1.msra.mxu0 %v1107
    %1109 = vmatprep.subr.mxu0 0.0
    %v1110 = vand.u32 %v139, 4294901760
    %1111 = vmatpush1.msra.mxu0 %v1110
    %1112 = vmatprep.subr.mxu0 0.0
    %v1113 = vand.u32 %v140, 4294901760
    %1114 = vmatpush1.msra.mxu0 %v1113
    %1115 = vmatprep.subr.mxu0 0.0
    %v1116 = vand.u32 %v141, 4294901760
    %1117 = vmatpush1.msra.mxu0 %v1116
    %1118 = vmatprep.subr.mxu0 0.0
    %v1119 = vand.u32 %v142, 4294901760
    %1120 = vmatpush1.msra.mxu0 %v1119
    %1121 = vmatprep.subr.mxu0 0.0
    %v1122 = vand.u32 %v143, 4294901760
    %1123 = vmatpush1.msra.mxu0 %v1122
    %1124 = vmatprep.subr.mxu0 0.0
    %v1125 = vand.u32 %v144, 4294901760
    %1126 = vmatpush1.msra.mxu0 %v1125
    %1127 = vmatprep.subr.mxu0 0.0
    %v1128 = vand.u32 %v145, 4294901760
    %1129 = vmatpush1.msra.mxu0 %v1128
    %1130 = vmatprep.subr.mxu0 0.0
    %v1131 = vand.u32 %v146, 4294901760
    %1132 = vmatpush1.msra.mxu0 %v1131
    %1133 = vmatprep.subr.mxu0 0.0
    %v1134 = vand.u32 %v147, 4294901760
    %1135 = vmatpush1.msra.mxu0 %v1134
    %1136 = vmatprep.subr.mxu0 0.0
    %v1137 = vand.u32 %v148, 4294901760
    %1138 = vmatpush1.msra.mxu0 %v1137
    %1139 = vmatprep.subr.mxu0 0.0
    %v1140 = vand.u32 %v149, 4294901760
    %1141 = vmatpush1.msra.mxu0 %v1140
    %1142 = vmatprep.subr.mxu0 0.0
    %v1143 = vand.u32 %v150, 4294901760
    %1144 = vmatpush1.msra.mxu0 %v1143
    %1145 = vmatprep.subr.mxu0 0.0
    %v1146 = vand.u32 %v151, 4294901760
    %1147 = vmatpush1.msra.mxu0 %v1146
    %1148 = vmatprep.subr.mxu0 0.0
    %v1149 = vand.u32 %v152, 4294901760
    %1150 = vmatpush1.msra.mxu0 %v1149
    %1151 = vmatprep.subr.mxu0 0.0
    %v1152 = vand.u32 %v153, 4294901760
    %1153 = vmatpush1.msra.mxu0 %v1152
    %1154 = vmatprep.subr.mxu0 0.0
    %v1155 = vand.u32 %v154, 4294901760
    %1156 = vmatpush1.msra.mxu0 %v1155
    %1157 = vmatprep.subr.mxu0 0.0
    %v1158 = vand.u32 %v155, 4294901760
    %1159 = vmatpush1.msra.mxu0 %v1158
    %1160 = vmatprep.subr.mxu0 0.0
    %v1161 = vand.u32 %v156, 4294901760
    %1162 = vmatpush1.msra.mxu0 %v1161
    %1163 = vmatprep.subr.mxu0 0.0
    %v1164 = vand.u32 %v157, 4294901760
    %1165 = vmatpush1.msra.mxu0 %v1164
    %1166 = vmatprep.subr.mxu0 0.0
    %v1167 = vand.u32 %v158, 4294901760
    %1168 = vmatpush1.msra.mxu0 %v1167
    %1169 = vmatprep.subr.mxu0 0.0
    %v1170 = vand.u32 %v159, 4294901760
    %1171 = vmatpush1.msra.mxu0 %v1170
    %1172 = vmatprep.subr.mxu0 0.0
    %v1173 = vand.u32 %v160, 4294901760
    %1174 = vmatpush1.msra.mxu0 %v1173
    %1175 = vmatprep.subr.mxu0 0.0
    %v1176 = vand.u32 %v161, 4294901760
    %1177 = vmatpush1.msra.mxu0 %v1176
    %1178 = vmatprep.subr.mxu0 0.0
    %v1179 = vand.u32 %v162, 4294901760
    %1180 = vmatpush1.msra.mxu0 %v1179
    %1181 = vmatprep.subr.mxu0 0.0
    %v1182 = vand.u32 %v163, 4294901760
    %1183 = vmatpush1.msra.mxu0 %v1182
    %1184 = vmatprep.subr.mxu0 0.0
    %v1185 = vand.u32 %v164, 4294901760
    %1186 = vmatpush1.msra.mxu0 %v1185
    %1187 = vmatprep.subr.mxu0 0.0
    %v1188 = vand.u32 %v165, 4294901760
    %1189 = vmatpush1.msra.mxu0 %v1188
    %v1190 = vand.u32 %v43, 4294901760
    %1191 = vmatprep.mubr.f32.mxu0 %v1190
    %v1192 = vand.u32 %v113, 4294901760
    %1193 = vmatmul.mubr.f32.gmra.mrb[0].mxu0 %v1192
    %v1194 = vpop.f32.mrb[0].mxu0
    %v1195 = vadd.f32 %v1070, %v1194
    %v1196 = vpop.f32.mrb[0].mxu0
    %v1197 = vand.u32 %v44, 4294901760
    %1198 = vmatprep.mubr.f32.mxu0 %v1197
    %v1199 = vand.u32 %v114, 4294901760
    %1200 = vmatmul.mubr.f32.gmra.mrb[0].mxu0 %v1199
    %v1201 = vpop.f32.mrb[0].mxu0
    %v1202 = vadd.f32 %v1077, %v1201
    %v1203 = vpop.f32.mrb[0].mxu0
    %v1204 = vand.u32 %v45, 4294901760
    %1205 = vmatprep.mubr.f32.mxu0 %v1204
    %v1206 = vand.u32 %v115, 4294901760
    %1207 = vmatmul.mubr.f32.gmra.mrb[0].mxu0 %v1206
    %v1208 = vpop.f32.mrb[0].mxu0
    %v1209 = vadd.f32 %v1084, %v1208
    %v1210 = vpop.f32.mrb[0].mxu0
    %v1211 = vand.u32 %v46, 4294901760
    %1212 = vmatprep.mubr.f32.mxu0 %v1211
    %v1213 = vand.u32 %v116, 4294901760
    %1214 = vmatmul.mubr.f32.gmra.mrb[0].mxu0 %v1213
    %v1215 = vpop.f32.mrb[0].mxu0
    %v1216 = vadd.f32 %v1091, %v1215
    %v1217 = vpop.f32.mrb[0].mxu0
    %1218 = vdwg.mxu0
    %1219 = vmatprep.subr.mxu0 0.0
    %v1220 = vand.u32 %v166, 4294901760
    %1221 = vmatpush1.msra.mxu0 %v1220
    %1222 = vmatprep.subr.mxu0 0.0
    %v1223 = vand.u32 %v167, 4294901760
    %1224 = vmatpush1.msra.mxu0 %v1223
    %1225 = vmatprep.subr.mxu0 0.0
    %v1226 = vand.u32 %v168, 4294901760
    %1227 = vmatpush1.msra.mxu0 %v1226
    %1228 = vmatprep.subr.mxu0 0.0
    %v1229 = vand.u32 %v169, 4294901760
    %1230 = vmatpush1.msra.mxu0 %v1229
    %1231 = vmatprep.subr.mxu0 0.0
    %v1232 = vand.u32 %v170, 4294901760
    %1233 = vmatpush1.msra.mxu0 %v1232
    %1234 = vmatprep.subr.mxu0 0.0
    %v1235 = vand.u32 %v171, 4294901760
    %1236 = vmatpush1.msra.mxu0 %v1235
    %1237 = vmatprep.subr.mxu0 0.0
    %v1238 = vand.u32 %v172, 4294901760
    %1239 = vmatpush1.msra.mxu0 %v1238
    %1240 = vmatprep.subr.mxu0 0.0
    %v1241 = vand.u32 %v173, 4294901760
    %1242 = vmatpush1.msra.mxu0 %v1241
    %1243 = vmatprep.subr.mxu0 0.0
    %v1244 = vand.u32 %v174, 4294901760
    %1245 = vmatpush1.msra.mxu0 %v1244
    %1246 = vmatprep.subr.mxu0 0.0
    %v1247 = vand.u32 %v175, 4294901760
    %1248 = vmatpush1.msra.mxu0 %v1247
    %1249 = vmatprep.subr.mxu0 0.0
    %v1250 = vand.u32 %v176, 4294901760
    %1251 = vmatpush1.msra.mxu0 %v1250
    %1252 = vmatprep.subr.mxu0 0.0
    %v1253 = vand.u32 %v177, 4294901760
    %1254 = vmatpush1.msra.mxu0 %v1253
    %1255 = vmatprep.subr.mxu0 0.0
    %v1256 = vand.u32 %v178, 4294901760
    %1257 = vmatpush1.msra.mxu0 %v1256
    %1258 = vmatprep.subr.mxu0 0.0
    %v1259 = vand.u32 %v179, 4294901760
    %1260 = vmatpush1.msra.mxu0 %v1259
    %1261 = vmatprep.subr.mxu0 0.0
    %v1262 = vand.u32 %v180, 4294901760
    %1263 = vmatpush1.msra.mxu0 %v1262
    %1264 = vmatprep.subr.mxu0 0.0
    %v1265 = vand.u32 %v181, 4294901760
    %1266 = vmatpush1.msra.mxu0 %v1265
    %1267 = vmatprep.subr.mxu0 0.0
    %1268 = vmatpush1.msra.mxu0 0.0
    %1269 = vmatprep.subr.mxu0 0.0
    %1270 = vmatpush1.msra.mxu0 0.0
    %1271 = vmatprep.subr.mxu0 0.0
    %1272 = vmatpush1.msra.mxu0 0.0
    %1273 = vmatprep.subr.mxu0 0.0
    %1274 = vmatpush1.msra.mxu0 0.0
    %1275 = vmatprep.subr.mxu0 0.0
    %1276 = vmatpush1.msra.mxu0 0.0
    %1277 = vmatprep.subr.mxu0 0.0
    %1278 = vmatpush1.msra.mxu0 0.0
    %1279 = vmatprep.subr.mxu0 0.0
    %1280 = vmatpush1.msra.mxu0 0.0
    %1281 = vmatprep.subr.mxu0 0.0
    %1282 = vmatpush1.msra.mxu0 0.0
    %1283 = vmatprep.subr.mxu0 0.0
    %1284 = vmatpush1.msra.mxu0 0.0
    %1285 = vmatprep.subr.mxu0 0.0
    %1286 = vmatpush1.msra.mxu0 0.0
    %1287 = vmatprep.subr.mxu0 0.0
    %1288 = vmatpush1.msra.mxu0 0.0
    %1289 = vmatprep.subr.mxu0 0.0
    %1290 = vmatpush1.msra.mxu0 0.0
    %1291 = vmatprep.subr.mxu0 0.0
    %1292 = vmatpush1.msra.mxu0 0.0
    %1293 = vmatprep.subr.mxu0 0.0
    %1294 = vmatpush1.msra.mxu0 0.0
    %1295 = vmatprep.subr.mxu0 0.0
    %1296 = vmatpush1.msra.mxu0 0.0
    %1297 = vmatprep.subr.mxu0 0.0
    %1298 = vmatpush1.msra.mxu0 0.0
    %1299 = vmatprep.mubr.f32.mxu0 0.0
    %v1300 = vand.u32 %v130, 4294901760
    %v1301 = vsub.f32 %v130, %v1300
    %v1302 = vand.u32 %v1301, 4294901760
    %v1303 = vsub.f32 %v1301, %v1302
    %v1304 = vand.u32 %v1303, 4294901760
    %1305 = vmatmul.mubr.f32.gmra.mrb[0].mxu0 %v1304
    %v1306 = vpop.f32.mrb[0].mxu0
    %v1307 = vadd.f32 %v1195, %v1306
    %v1308 = vpop.f32.mrb[0].mxu0
    %1309 = vmatprep.mubr.f32.mxu0 0.0
    %v1310 = vand.u32 %v131, 4294901760
    %v1311 = vsub.f32 %v131, %v1310
    %v1312 = vand.u32 %v1311, 4294901760
    %v1313 = vsub.f32 %v1311, %v1312
    %v1314 = vand.u32 %v1313, 4294901760
    %1315 = vmatmul.mubr.f32.gmra.mrb[0].mxu0 %v1314
    %v1316 = vpop.f32.mrb[0].mxu0
    %v1317 = vadd.f32 %v1202, %v1316
    %v1318 = vpop.f32.mrb[0].mxu0
    %1319 = vmatprep.mubr.f32.mxu0 0.0
    %v1320 = vand.u32 %v132, 4294901760
    %v1321 = vsub.f32 %v132, %v1320
    %v1322 = vand.u32 %v1321, 4294901760
    %v1323 = vsub.f32 %v1321, %v1322
    %v1324 = vand.u32 %v1323, 4294901760
    %1325 = vmatmul.mubr.f32.gmra.mrb[0].mxu0 %v1324
    %v1326 = vpop.f32.mrb[0].mxu0
    %v1327 = vadd.f32 %v1209, %v1326
    %v1328 = vpop.f32.mrb[0].mxu0
    %1329 = vmatprep.mubr.f32.mxu0 0.0
    %v1330 = vand.u32 %v133, 4294901760
    %v1331 = vsub.f32 %v133, %v1330
    %v1332 = vand.u32 %v1331, 4294901760
    %v1333 = vsub.f32 %v1331, %v1332
    %v1334 = vand.u32 %v1333, 4294901760
    %1335 = vmatmul.mubr.f32.gmra.mrb[0].mxu0 %v1334
    %v1336 = vpop.f32.mrb[0].mxu0
    %v1337 = vadd.f32 %v1216, %v1336
    %v1338 = vpop.f32.mrb[0].mxu0
    %1339 = vdwg.mxu0
    %1340 = vmatprep.subr.mxu0 0.0
    %v1341 = vand.u32 %v166, 4294901760
    %v1342 = vsub.f32 %v166, %v1341
    %v1343 = vand.u32 %v1342, 4294901760
    %v1344 = vsub.f32 %v1342, %v1343
    %v1345 = vand.u32 %v1344, 4294901760
    %1346 = vmatpush1.msra.mxu0 %v1345
    %1347 = vmatprep.subr.mxu0 0.0
    %v1348 = vand.u32 %v167, 4294901760
    %v1349 = vsub.f32 %v167, %v1348
    %v1350 = vand.u32 %v1349, 4294901760
    %v1351 = vsub.f32 %v1349, %v1350
    %v1352 = vand.u32 %v1351, 4294901760
    %1353 = vmatpush1.msra.mxu0 %v1352
    %1354 = vmatprep.subr.mxu0 0.0
    %v1355 = vand.u32 %v168, 4294901760
    %v1356 = vsub.f32 %v168, %v1355
    %v1357 = vand.u32 %v1356, 4294901760
    %v1358 = vsub.f32 %v1356, %v1357
    %v1359 = vand.u32 %v1358, 4294901760
    %1360 = vmatpush1.msra.mxu0 %v1359
    %1361 = vmatprep.subr.mxu0 0.0
    %v1362 = vand.u32 %v169, 4294901760
    %v1363 = vsub.f32 %v169, %v1362
    %v1364 = vand.u32 %v1363, 4294901760
    %v1365 = vsub.f32 %v1363, %v1364
    %v1366 = vand.u32 %v1365, 4294901760
    %1367 = vmatpush1.msra.mxu0 %v1366
    %1368 = vmatprep.subr.mxu0 0.0
    %v1369 = vand.u32 %v170, 4294901760
    %v1370 = vsub.f32 %v170, %v1369
    %v1371 = vand.u32 %v1370, 4294901760
    %v1372 = vsub.f32 %v1370, %v1371
    %v1373 = vand.u32 %v1372, 4294901760
    %1374 = vmatpush1.msra.mxu0 %v1373
    %1375 = vmatprep.subr.mxu0 0.0
    %v1376 = vand.u32 %v171, 4294901760
    %v1377 = vsub.f32 %v171, %v1376
    %v1378 = vand.u32 %v1377, 4294901760
    %v1379 = vsub.f32 %v1377, %v1378
    %v1380 = vand.u32 %v1379, 4294901760
    %1381 = vmatpush1.msra.mxu0 %v1380
    %1382 = vmatprep.subr.mxu0 0.0
    %v1383 = vand.u32 %v172, 4294901760
    %v1384 = vsub.f32 %v172, %v1383
    %v1385 = vand.u32 %v1384, 4294901760
    %v1386 = vsub.f32 %v1384, %v1385
    %v1387 = vand.u32 %v1386, 4294901760
    %1388 = vmatpush1.msra.mxu0 %v1387
    %1389 = vmatprep.subr.mxu0 0.0
    %v1390 = vand.u32 %v173, 4294901760
    %v1391 = vsub.f32 %v173, %v1390
    %v1392 = vand.u32 %v1391, 4294901760
    %v1393 = vsub.f32 %v1391, %v1392
    %v1394 = vand.u32 %v1393, 4294901760
    %1395 = vmatpush1.msra.mxu0 %v1394
    %1396 = vmatprep.subr.mxu0 0.0
    %v1397 = vand.u32 %v174, 4294901760
    %v1398 = vsub.f32 %v174, %v1397
    %v1399 = vand.u32 %v1398, 4294901760
    %v1400 = vsub.f32 %v1398, %v1399
    %v1401 = vand.u32 %v1400, 4294901760
    %1402 = vmatpush1.msra.mxu0 %v1401
    %1403 = vmatprep.subr.mxu0 0.0
    %v1404 = vand.u32 %v175, 4294901760
    %v1405 = vsub.f32 %v175, %v1404
    %v1406 = vand.u32 %v1405, 4294901760
    %v1407 = vsub.f32 %v1405, %v1406
    %v1408 = vand.u32 %v1407, 4294901760
    %1409 = vmatpush1.msra.mxu0 %v1408
    %1410 = vmatprep.subr.mxu0 0.0
    %v1411 = vand.u32 %v176, 4294901760
    %v1412 = vsub.f32 %v176, %v1411
    %v1413 = vand.u32 %v1412, 4294901760
    %v1414 = vsub.f32 %v1412, %v1413
    %v1415 = vand.u32 %v1414, 4294901760
    %1416 = vmatpush1.msra.mxu0 %v1415
    %1417 = vmatprep.subr.mxu0 0.0
    %v1418 = vand.u32 %v177, 4294901760
    %v1419 = vsub.f32 %v177, %v1418
    %v1420 = vand.u32 %v1419, 4294901760
    %v1421 = vsub.f32 %v1419, %v1420
    %v1422 = vand.u32 %v1421, 4294901760
    %1423 = vmatpush1.msra.mxu0 %v1422
    %1424 = vmatprep.subr.mxu0 0.0
    %v1425 = vand.u32 %v178, 4294901760
    %v1426 = vsub.f32 %v178, %v1425
    %v1427 = vand.u32 %v1426, 4294901760
    %v1428 = vsub.f32 %v1426, %v1427
    %v1429 = vand.u32 %v1428, 4294901760
    %1430 = vmatpush1.msra.mxu0 %v1429
    %1431 = vmatprep.subr.mxu0 0.0
    %v1432 = vand.u32 %v179, 4294901760
    %v1433 = vsub.f32 %v179, %v1432
    %v1434 = vand.u32 %v1433, 4294901760
    %v1435 = vsub.f32 %v1433, %v1434
    %v1436 = vand.u32 %v1435, 4294901760
    %1437 = vmatpush1.msra.mxu0 %v1436
    %1438 = vmatprep.subr.mxu0 0.0
    %v1439 = vand.u32 %v180, 4294901760
    %v1440 = vsub.f32 %v180, %v1439
    %v1441 = vand.u32 %v1440, 4294901760
    %v1442 = vsub.f32 %v1440, %v1441
    %v1443 = vand.u32 %v1442, 4294901760
    %1444 = vmatpush1.msra.mxu0 %v1443
    %1445 = vmatprep.subr.mxu0 0.0
    %v1446 = vand.u32 %v181, 4294901760
    %v1447 = vsub.f32 %v181, %v1446
    %v1448 = vand.u32 %v1447, 4294901760
    %v1449 = vsub.f32 %v1447, %v1448
    %v1450 = vand.u32 %v1449, 4294901760
    %1451 = vmatpush1.msra.mxu0 %v1450
    %1452 = vmatprep.subr.mxu0 0.0
    %1453 = vmatpush1.msra.mxu0 0.0
    %1454 = vmatprep.subr.mxu0 0.0
    %1455 = vmatpush1.msra.mxu0 0.0
    %1456 = vmatprep.subr.mxu0 0.0
    %1457 = vmatpush1.msra.mxu0 0.0
    %1458 = vmatprep.subr.mxu0 0.0
    %1459 = vmatpush1.msra.mxu0 0.0
    %1460 = vmatprep.subr.mxu0 0.0
    %1461 = vmatpush1.msra.mxu0 0.0
    %1462 = vmatprep.subr.mxu0 0.0
    %1463 = vmatpush1.msra.mxu0 0.0
    %1464 = vmatprep.subr.mxu0 0.0
    %1465 = vmatpush1.msra.mxu0 0.0
    %1466 = vmatprep.subr.mxu0 0.0
    %1467 = vmatpush1.msra.mxu0 0.0
    %1468 = vmatprep.subr.mxu0 0.0
    %1469 = vmatpush1.msra.mxu0 0.0
    %1470 = vmatprep.subr.mxu0 0.0
    %1471 = vmatpush1.msra.mxu0 0.0
    %1472 = vmatprep.subr.mxu0 0.0
    %1473 = vmatpush1.msra.mxu0 0.0
    %1474 = vmatprep.subr.mxu0 0.0
    %1475 = vmatpush1.msra.mxu0 0.0
    %1476 = vmatprep.subr.mxu0 0.0
    %1477 = vmatpush1.msra.mxu0 0.0
    %1478 = vmatprep.subr.mxu0 0.0
    %1479 = vmatpush1.msra.mxu0 0.0
    %1480 = vmatprep.subr.mxu0 0.0
    %1481 = vmatpush1.msra.mxu0 0.0
    %1482 = vmatprep.subr.mxu0 0.0
    %1483 = vmatpush1.msra.mxu0 0.0
    %1484 = vmatprep.mubr.f32.mxu0 0.0
    %v1485 = vand.u32 %v130, 4294901760
    %1486 = vmatmul.mubr.f32.gmra.mrb[0].mxu0 %v1485
    %v1487 = vpop.f32.mrb[0].mxu0
    %v1488 = vadd.f32 %v1307, %v1487
    %v1489 = vpop.f32.mrb[0].mxu0
    %1490 = vmatprep.mubr.f32.mxu0 0.0
    %v1491 = vand.u32 %v131, 4294901760
    %1492 = vmatmul.mubr.f32.gmra.mrb[0].mxu0 %v1491
    %v1493 = vpop.f32.mrb[0].mxu0
    %v1494 = vadd.f32 %v1317, %v1493
    %v1495 = vpop.f32.mrb[0].mxu0
    %1496 = vmatprep.mubr.f32.mxu0 0.0
    %v1497 = vand.u32 %v132, 4294901760
    %1498 = vmatmul.mubr.f32.gmra.mrb[0].mxu0 %v1497
    %v1499 = vpop.f32.mrb[0].mxu0
    %v1500 = vadd.f32 %v1327, %v1499
    %v1501 = vpop.f32.mrb[0].mxu0
    %1502 = vmatprep.mubr.f32.mxu0 0.0
    %v1503 = vand.u32 %v133, 4294901760
    %1504 = vmatmul.mubr.f32.gmra.mrb[0].mxu0 %v1503
    %v1505 = vpop.f32.mrb[0].mxu0
    %v1506 = vadd.f32 %v1337, %v1505
    %v1507 = vpop.f32.mrb[0].mxu0
    %1508 = vdwg.mxu0
    %1509 = vmatprep.subr.mxu0 0.0
    %v1510 = vand.u32 %v166, 4294901760
    %v1511 = vsub.f32 %v166, %v1510
    %1512 = vmatpush1.msra.mxu0 %v1511
    %1513 = vmatprep.subr.mxu0 0.0
    %v1514 = vand.u32 %v167, 4294901760
    %v1515 = vsub.f32 %v167, %v1514
    %1516 = vmatpush1.msra.mxu0 %v1515
    %1517 = vmatprep.subr.mxu0 0.0
    %v1518 = vand.u32 %v168, 4294901760
    %v1519 = vsub.f32 %v168, %v1518
    %1520 = vmatpush1.msra.mxu0 %v1519
    %1521 = vmatprep.subr.mxu0 0.0
    %v1522 = vand.u32 %v169, 4294901760
    %v1523 = vsub.f32 %v169, %v1522
    %1524 = vmatpush1.msra.mxu0 %v1523
    %1525 = vmatprep.subr.mxu0 0.0
    %v1526 = vand.u32 %v170, 4294901760
    %v1527 = vsub.f32 %v170, %v1526
    %1528 = vmatpush1.msra.mxu0 %v1527
    %1529 = vmatprep.subr.mxu0 0.0
    %v1530 = vand.u32 %v171, 4294901760
    %v1531 = vsub.f32 %v171, %v1530
    %1532 = vmatpush1.msra.mxu0 %v1531
    %1533 = vmatprep.subr.mxu0 0.0
    %v1534 = vand.u32 %v172, 4294901760
    %v1535 = vsub.f32 %v172, %v1534
    %1536 = vmatpush1.msra.mxu0 %v1535
    %1537 = vmatprep.subr.mxu0 0.0
    %v1538 = vand.u32 %v173, 4294901760
    %v1539 = vsub.f32 %v173, %v1538
    %1540 = vmatpush1.msra.mxu0 %v1539
    %1541 = vmatprep.subr.mxu0 0.0
    %v1542 = vand.u32 %v174, 4294901760
    %v1543 = vsub.f32 %v174, %v1542
    %1544 = vmatpush1.msra.mxu0 %v1543
    %1545 = vmatprep.subr.mxu0 0.0
    %v1546 = vand.u32 %v175, 4294901760
    %v1547 = vsub.f32 %v175, %v1546
    %1548 = vmatpush1.msra.mxu0 %v1547
    %1549 = vmatprep.subr.mxu0 0.0
    %v1550 = vand.u32 %v176, 4294901760
    %v1551 = vsub.f32 %v176, %v1550
    %1552 = vmatpush1.msra.mxu0 %v1551
    %1553 = vmatprep.subr.mxu0 0.0
    %v1554 = vand.u32 %v177, 4294901760
    %v1555 = vsub.f32 %v177, %v1554
    %1556 = vmatpush1.msra.mxu0 %v1555
    %1557 = vmatprep.subr.mxu0 0.0
    %v1558 = vand.u32 %v178, 4294901760
    %v1559 = vsub.f32 %v178, %v1558
    %1560 = vmatpush1.msra.mxu0 %v1559
    %1561 = vmatprep.subr.mxu0 0.0
    %v1562 = vand.u32 %v179, 4294901760
    %v1563 = vsub.f32 %v179, %v1562
    %1564 = vmatpush1.msra.mxu0 %v1563
    %1565 = vmatprep.subr.mxu0 0.0
    %v1566 = vand.u32 %v180, 4294901760
    %v1567 = vsub.f32 %v180, %v1566
    %1568 = vmatpush1.msra.mxu0 %v1567
    %1569 = vmatprep.subr.mxu0 0.0
    %v1570 = vand.u32 %v181, 4294901760
    %v1571 = vsub.f32 %v181, %v1570
    %1572 = vmatpush1.msra.mxu0 %v1571
    %1573 = vmatprep.subr.mxu0 0.0
    %1574 = vmatpush1.msra.mxu0 0.0
    %1575 = vmatprep.subr.mxu0 0.0
    %1576 = vmatpush1.msra.mxu0 0.0
    %1577 = vmatprep.subr.mxu0 0.0
    %1578 = vmatpush1.msra.mxu0 0.0
    %1579 = vmatprep.subr.mxu0 0.0
    %1580 = vmatpush1.msra.mxu0 0.0
    %1581 = vmatprep.subr.mxu0 0.0
    %1582 = vmatpush1.msra.mxu0 0.0
    %1583 = vmatprep.subr.mxu0 0.0
    %1584 = vmatpush1.msra.mxu0 0.0
    %1585 = vmatprep.subr.mxu0 0.0
    %1586 = vmatpush1.msra.mxu0 0.0
    %1587 = vmatprep.subr.mxu0 0.0
    %1588 = vmatpush1.msra.mxu0 0.0
    %1589 = vmatprep.subr.mxu0 0.0
    %1590 = vmatpush1.msra.mxu0 0.0
    %1591 = vmatprep.subr.mxu0 0.0
    %1592 = vmatpush1.msra.mxu0 0.0
    %1593 = vmatprep.subr.mxu0 0.0
    %1594 = vmatpush1.msra.mxu0 0.0
    %1595 = vmatprep.subr.mxu0 0.0
    %1596 = vmatpush1.msra.mxu0 0.0
    %1597 = vmatprep.subr.mxu0 0.0
    %1598 = vmatpush1.msra.mxu0 0.0
    %1599 = vmatprep.subr.mxu0 0.0
    %1600 = vmatpush1.msra.mxu0 0.0
    %1601 = vmatprep.subr.mxu0 0.0
    %1602 = vmatpush1.msra.mxu0 0.0
    %1603 = vmatprep.subr.mxu0 0.0
    %1604 = vmatpush1.msra.mxu0 0.0
    %1605 = vmatprep.mubr.f32.mxu0 0.0
    %v1606 = vand.u32 %v130, 4294901760
    %v1607 = vsub.f32 %v130, %v1606
    %1608 = vmatmul.mubr.f32.gmra.mrb[0].mxu0 %v1607
    %v1609 = vpop.f32.mrb[0].mxu0
    %v1610 = vadd.f32 %v1488, %v1609
    %v1611 = vpop.f32.mrb[0].mxu0
    %1612 = vmatprep.mubr.f32.mxu0 0.0
    %v1613 = vand.u32 %v131, 4294901760
    %v1614 = vsub.f32 %v131, %v1613
    %1615 = vmatmul.mubr.f32.gmra.mrb[0].mxu0 %v1614
    %v1616 = vpop.f32.mrb[0].mxu0
    %v1617 = vadd.f32 %v1494, %v1616
    %v1618 = vpop.f32.mrb[0].mxu0
    %1619 = vmatprep.mubr.f32.mxu0 0.0
    %v1620 = vand.u32 %v132, 4294901760
    %v1621 = vsub.f32 %v132, %v1620
    %1622 = vmatmul.mubr.f32.gmra.mrb[0].mxu0 %v1621
    %v1623 = vpop.f32.mrb[0].mxu0
    %v1624 = vadd.f32 %v1500, %v1623
    %v1625 = vpop.f32.mrb[0].mxu0
    %1626 = vmatprep.mubr.f32.mxu0 0.0
    %v1627 = vand.u32 %v133, 4294901760
    %v1628 = vsub.f32 %v133, %v1627
    %1629 = vmatmul.mubr.f32.gmra.mrb[0].mxu0 %v1628
    %v1630 = vpop.f32.mrb[0].mxu0
    %v1631 = vadd.f32 %v1506, %v1630
    %v1632 = vpop.f32.mrb[0].mxu0
    %1633 = vdwg.mxu0
    %1634 = vmatprep.subr.mxu0 0.0
    %v1635 = vand.u32 %v166, 4294901760
    %1636 = vmatpush1.msra.mxu0 %v1635
    %1637 = vmatprep.subr.mxu0 0.0
    %v1638 = vand.u32 %v167, 4294901760
    %1639 = vmatpush1.msra.mxu0 %v1638
    %1640 = vmatprep.subr.mxu0 0.0
    %v1641 = vand.u32 %v168, 4294901760
    %1642 = vmatpush1.msra.mxu0 %v1641
    %1643 = vmatprep.subr.mxu0 0.0
    %v1644 = vand.u32 %v169, 4294901760
    %1645 = vmatpush1.msra.mxu0 %v1644
    %1646 = vmatprep.subr.mxu0 0.0
    %v1647 = vand.u32 %v170, 4294901760
    %1648 = vmatpush1.msra.mxu0 %v1647
    %1649 = vmatprep.subr.mxu0 0.0
    %v1650 = vand.u32 %v171, 4294901760
    %1651 = vmatpush1.msra.mxu0 %v1650
    %1652 = vmatprep.subr.mxu0 0.0
    %v1653 = vand.u32 %v172, 4294901760
    %1654 = vmatpush1.msra.mxu0 %v1653
    %1655 = vmatprep.subr.mxu0 0.0
    %v1656 = vand.u32 %v173, 4294901760
    %1657 = vmatpush1.msra.mxu0 %v1656
    %1658 = vmatprep.subr.mxu0 0.0
    %v1659 = vand.u32 %v174, 4294901760
    %1660 = vmatpush1.msra.mxu0 %v1659
    %1661 = vmatprep.subr.mxu0 0.0
    %v1662 = vand.u32 %v175, 4294901760
    %1663 = vmatpush1.msra.mxu0 %v1662
    %1664 = vmatprep.subr.mxu0 0.0
    %v1665 = vand.u32 %v176, 4294901760
    %1666 = vmatpush1.msra.mxu0 %v1665
    %1667 = vmatprep.subr.mxu0 0.0
    %v1668 = vand.u32 %v177, 4294901760
    %1669 = vmatpush1.msra.mxu0 %v1668
    %1670 = vmatprep.subr.mxu0 0.0
    %v1671 = vand.u32 %v178, 4294901760
    %1672 = vmatpush1.msra.mxu0 %v1671
    %1673 = vmatprep.subr.mxu0 0.0
    %v1674 = vand.u32 %v179, 4294901760
    %1675 = vmatpush1.msra.mxu0 %v1674
    %1676 = vmatprep.subr.mxu0 0.0
    %v1677 = vand.u32 %v180, 4294901760
    %1678 = vmatpush1.msra.mxu0 %v1677
    %1679 = vmatprep.subr.mxu0 0.0
    %v1680 = vand.u32 %v181, 4294901760
    %1681 = vmatpush1.msra.mxu0 %v1680
    %1682 = vmatprep.subr.mxu0 0.0
    %1683 = vmatpush1.msra.mxu0 0.0
    %1684 = vmatprep.subr.mxu0 0.0
    %1685 = vmatpush1.msra.mxu0 0.0
    %1686 = vmatprep.subr.mxu0 0.0
    %1687 = vmatpush1.msra.mxu0 0.0
    %1688 = vmatprep.subr.mxu0 0.0
    %1689 = vmatpush1.msra.mxu0 0.0
    %1690 = vmatprep.subr.mxu0 0.0
    %1691 = vmatpush1.msra.mxu0 0.0
    %1692 = vmatprep.subr.mxu0 0.0
    %1693 = vmatpush1.msra.mxu0 0.0
    %1694 = vmatprep.subr.mxu0 0.0
    %1695 = vmatpush1.msra.mxu0 0.0
    %1696 = vmatprep.subr.mxu0 0.0
    %1697 = vmatpush1.msra.mxu0 0.0
    %1698 = vmatprep.subr.mxu0 0.0
    %1699 = vmatpush1.msra.mxu0 0.0
    %1700 = vmatprep.subr.mxu0 0.0
    %1701 = vmatpush1.msra.mxu0 0.0
    %1702 = vmatprep.subr.mxu0 0.0
    %1703 = vmatpush1.msra.mxu0 0.0
    %1704 = vmatprep.subr.mxu0 0.0
    %1705 = vmatpush1.msra.mxu0 0.0
    %1706 = vmatprep.subr.mxu0 0.0
    %1707 = vmatpush1.msra.mxu0 0.0
    %1708 = vmatprep.subr.mxu0 0.0
    %1709 = vmatpush1.msra.mxu0 0.0
    %1710 = vmatprep.subr.mxu0 0.0
    %1711 = vmatpush1.msra.mxu0 0.0
    %1712 = vmatprep.subr.mxu0 0.0
    %1713 = vmatpush1.msra.mxu0 0.0
    %1714 = vmatprep.mubr.f32.mxu0 0.0
    %v1715 = vand.u32 %v130, 4294901760
    %v1716 = vsub.f32 %v130, %v1715
    %v1717 = vand.u32 %v1716, 4294901760
    %1718 = vmatmul.mubr.f32.gmra.mrb[0].mxu0 %v1717
    %v1719 = vpop.f32.mrb[0].mxu0
    %v1720 = vadd.f32 %v1610, %v1719
    %v1721 = vpop.f32.mrb[0].mxu0
    %1722 = vmatprep.mubr.f32.mxu0 0.0
    %v1723 = vand.u32 %v131, 4294901760
    %v1724 = vsub.f32 %v131, %v1723
    %v1725 = vand.u32 %v1724, 4294901760
    %1726 = vmatmul.mubr.f32.gmra.mrb[0].mxu0 %v1725
    %v1727 = vpop.f32.mrb[0].mxu0
    %v1728 = vadd.f32 %v1617, %v1727
    %v1729 = vpop.f32.mrb[0].mxu0
    %1730 = vmatprep.mubr.f32.mxu0 0.0
    %v1731 = vand.u32 %v132, 4294901760
    %v1732 = vsub.f32 %v132, %v1731
    %v1733 = vand.u32 %v1732, 4294901760
    %1734 = vmatmul.mubr.f32.gmra.mrb[0].mxu0 %v1733
    %v1735 = vpop.f32.mrb[0].mxu0
    %v1736 = vadd.f32 %v1624, %v1735
    %v1737 = vpop.f32.mrb[0].mxu0
    %1738 = vmatprep.mubr.f32.mxu0 0.0
    %v1739 = vand.u32 %v133, 4294901760
    %v1740 = vsub.f32 %v133, %v1739
    %v1741 = vand.u32 %v1740, 4294901760
    %1742 = vmatmul.mubr.f32.gmra.mrb[0].mxu0 %v1741
    %v1743 = vpop.f32.mrb[0].mxu0
    %v1744 = vadd.f32 %v1631, %v1743
    %v1745 = vpop.f32.mrb[0].mxu0
    %1746 = vdwg.mxu0
    %1747 = vmatprep.subr.mxu0 0.0
    %v1748 = vand.u32 %v166, 4294901760
    %v1749 = vsub.f32 %v166, %v1748
    %v1750 = vand.u32 %v1749, 4294901760
    %1751 = vmatpush1.msra.mxu0 %v1750
    %1752 = vmatprep.subr.mxu0 0.0
    %v1753 = vand.u32 %v167, 4294901760
    %v1754 = vsub.f32 %v167, %v1753
    %v1755 = vand.u32 %v1754, 4294901760
    %1756 = vmatpush1.msra.mxu0 %v1755
    %1757 = vmatprep.subr.mxu0 0.0
    %v1758 = vand.u32 %v168, 4294901760
    %v1759 = vsub.f32 %v168, %v1758
    %v1760 = vand.u32 %v1759, 4294901760
    %1761 = vmatpush1.msra.mxu0 %v1760
    %1762 = vmatprep.subr.mxu0 0.0
    %v1763 = vand.u32 %v169, 4294901760
    %v1764 = vsub.f32 %v169, %v1763
    %v1765 = vand.u32 %v1764, 4294901760
    %1766 = vmatpush1.msra.mxu0 %v1765
    %1767 = vmatprep.subr.mxu0 0.0
    %v1768 = vand.u32 %v170, 4294901760
    %v1769 = vsub.f32 %v170, %v1768
    %v1770 = vand.u32 %v1769, 4294901760
    %1771 = vmatpush1.msra.mxu0 %v1770
    %1772 = vmatprep.subr.mxu0 0.0
    %v1773 = vand.u32 %v171, 4294901760
    %v1774 = vsub.f32 %v171, %v1773
    %v1775 = vand.u32 %v1774, 4294901760
    %1776 = vmatpush1.msra.mxu0 %v1775
    %1777 = vmatprep.subr.mxu0 0.0
    %v1778 = vand.u32 %v172, 4294901760
    %v1779 = vsub.f32 %v172, %v1778
    %v1780 = vand.u32 %v1779, 4294901760
    %1781 = vmatpush1.msra.mxu0 %v1780
    %1782 = vmatprep.subr.mxu0 0.0
    %v1783 = vand.u32 %v173, 4294901760
    %v1784 = vsub.f32 %v173, %v1783
    %v1785 = vand.u32 %v1784, 4294901760
    %1786 = vmatpush1.msra.mxu0 %v1785
    %1787 = vmatprep.subr.mxu0 0.0
    %v1788 = vand.u32 %v174, 4294901760
    %v1789 = vsub.f32 %v174, %v1788
    %v1790 = vand.u32 %v1789, 4294901760
    %1791 = vmatpush1.msra.mxu0 %v1790
    %1792 = vmatprep.subr.mxu0 0.0
    %v1793 = vand.u32 %v175, 4294901760
    %v1794 = vsub.f32 %v175, %v1793
    %v1795 = vand.u32 %v1794, 4294901760
    %1796 = vmatpush1.msra.mxu0 %v1795
    %1797 = vmatprep.subr.mxu0 0.0
    %v1798 = vand.u32 %v176, 4294901760
    %v1799 = vsub.f32 %v176, %v1798
    %v1800 = vand.u32 %v1799, 4294901760
    %1801 = vmatpush1.msra.mxu0 %v1800
    %1802 = vmatprep.subr.mxu0 0.0
    %v1803 = vand.u32 %v177, 4294901760
    %v1804 = vsub.f32 %v177, %v1803
    %v1805 = vand.u32 %v1804, 4294901760
    %1806 = vmatpush1.msra.mxu0 %v1805
    %1807 = vmatprep.subr.mxu0 0.0
    %v1808 = vand.u32 %v178, 4294901760
    %v1809 = vsub.f32 %v178, %v1808
    %v1810 = vand.u32 %v1809, 4294901760
    %1811 = vmatpush1.msra.mxu0 %v1810
    %1812 = vmatprep.subr.mxu0 0.0
    %v1813 = vand.u32 %v179, 4294901760
    %v1814 = vsub.f32 %v179, %v1813
    %v1815 = vand.u32 %v1814, 4294901760
    %1816 = vmatpush1.msra.mxu0 %v1815
    %1817 = vmatprep.subr.mxu0 0.0
    %v1818 = vand.u32 %v180, 4294901760
    %v1819 = vsub.f32 %v180, %v1818
    %v1820 = vand.u32 %v1819, 4294901760
    %1821 = vmatpush1.msra.mxu0 %v1820
    %1822 = vmatprep.subr.mxu0 0.0
    %v1823 = vand.u32 %v181, 4294901760
    %v1824 = vsub.f32 %v181, %v1823
    %v1825 = vand.u32 %v1824, 4294901760
    %1826 = vmatpush1.msra.mxu0 %v1825
    %1827 = vmatprep.subr.mxu0 0.0
    %1828 = vmatpush1.msra.mxu0 0.0
    %1829 = vmatprep.subr.mxu0 0.0
    %1830 = vmatpush1.msra.mxu0 0.0
    %1831 = vmatprep.subr.mxu0 0.0
    %1832 = vmatpush1.msra.mxu0 0.0
    %1833 = vmatprep.subr.mxu0 0.0
    %1834 = vmatpush1.msra.mxu0 0.0
    %1835 = vmatprep.subr.mxu0 0.0
    %1836 = vmatpush1.msra.mxu0 0.0
    %1837 = vmatprep.subr.mxu0 0.0
    %1838 = vmatpush1.msra.mxu0 0.0
    %1839 = vmatprep.subr.mxu0 0.0
    %1840 = vmatpush1.msra.mxu0 0.0
    %1841 = vmatprep.subr.mxu0 0.0
    %1842 = vmatpush1.msra.mxu0 0.0
    %1843 = vmatprep.subr.mxu0 0.0
    %1844 = vmatpush1.msra.mxu0 0.0
    %1845 = vmatprep.subr.mxu0 0.0
    %1846 = vmatpush1.msra.mxu0 0.0
    %1847 = vmatprep.subr.mxu0 0.0
    %1848 = vmatpush1.msra.mxu0 0.0
    %1849 = vmatprep.subr.mxu0 0.0
    %1850 = vmatpush1.msra.mxu0 0.0
    %1851 = vmatprep.subr.mxu0 0.0
    %1852 = vmatpush1.msra.mxu0 0.0
    %1853 = vmatprep.subr.mxu0 0.0
    %1854 = vmatpush1.msra.mxu0 0.0
    %1855 = vmatprep.subr.mxu0 0.0
    %1856 = vmatpush1.msra.mxu0 0.0
    %1857 = vmatprep.subr.mxu0 0.0
    %1858 = vmatpush1.msra.mxu0 0.0
    %1859 = vmatprep.mubr.f32.mxu0 0.0
    %v1860 = vand.u32 %v130, 4294901760
    %1861 = vmatmul.mubr.f32.gmra.mrb[0].mxu0 %v1860
    %v1862 = vpop.f32.mrb[0].mxu0
    %v1863 = vadd.f32 %v1720, %v1862
    %v1864 = vpop.f32.mrb[0].mxu0
    %1865 = vmatprep.mubr.f32.mxu0 0.0
    %v1866 = vand.u32 %v131, 4294901760
    %1867 = vmatmul.mubr.f32.gmra.mrb[0].mxu0 %v1866
    %v1868 = vpop.f32.mrb[0].mxu0
    %v1869 = vadd.f32 %v1728, %v1868
    %v1870 = vpop.f32.mrb[0].mxu0
    %1871 = vmatprep.mubr.f32.mxu0 0.0
    %v1872 = vand.u32 %v132, 4294901760
    %1873 = vmatmul.mubr.f32.gmra.mrb[0].mxu0 %v1872
    %v1874 = vpop.f32.mrb[0].mxu0
    %v1875 = vadd.f32 %v1736, %v1874
    %v1876 = vpop.f32.mrb[0].mxu0
    %1877 = vmatprep.mubr.f32.mxu0 0.0
    %v1878 = vand.u32 %v133, 4294901760
    %1879 = vmatmul.mubr.f32.gmra.mrb[0].mxu0 %v1878
    %v1880 = vpop.f32.mrb[0].mxu0
    %v1881 = vadd.f32 %v1744, %v1880
    %v1882 = vpop.f32.mrb[0].mxu0
    %1883 = vdwg.mxu0
    %1884 = vmatprep.subr.mxu0 0.0
    %v1885 = vand.u32 %v166, 4294901760
    %1886 = vmatpush1.msra.mxu0 %v1885
    %1887 = vmatprep.subr.mxu0 0.0
    %v1888 = vand.u32 %v167, 4294901760
    %1889 = vmatpush1.msra.mxu0 %v1888
    %1890 = vmatprep.subr.mxu0 0.0
    %v1891 = vand.u32 %v168, 4294901760
    %1892 = vmatpush1.msra.mxu0 %v1891
    %1893 = vmatprep.subr.mxu0 0.0
    %v1894 = vand.u32 %v169, 4294901760
    %1895 = vmatpush1.msra.mxu0 %v1894
    %1896 = vmatprep.subr.mxu0 0.0
    %v1897 = vand.u32 %v170, 4294901760
    %1898 = vmatpush1.msra.mxu0 %v1897
    %1899 = vmatprep.subr.mxu0 0.0
    %v1900 = vand.u32 %v171, 4294901760
    %1901 = vmatpush1.msra.mxu0 %v1900
    %1902 = vmatprep.subr.mxu0 0.0
    %v1903 = vand.u32 %v172, 4294901760
    %1904 = vmatpush1.msra.mxu0 %v1903
    %1905 = vmatprep.subr.mxu0 0.0
    %v1906 = vand.u32 %v173, 4294901760
    %1907 = vmatpush1.msra.mxu0 %v1906
    %1908 = vmatprep.subr.mxu0 0.0
    %v1909 = vand.u32 %v174, 4294901760
    %1910 = vmatpush1.msra.mxu0 %v1909
    %1911 = vmatprep.subr.mxu0 0.0
    %v1912 = vand.u32 %v175, 4294901760
    %1913 = vmatpush1.msra.mxu0 %v1912
    %1914 = vmatprep.subr.mxu0 0.0
    %v1915 = vand.u32 %v176, 4294901760
    %1916 = vmatpush1.msra.mxu0 %v1915
    %1917 = vmatprep.subr.mxu0 0.0
    %v1918 = vand.u32 %v177, 4294901760
    %1919 = vmatpush1.msra.mxu0 %v1918
    %1920 = vmatprep.subr.mxu0 0.0
    %v1921 = vand.u32 %v178, 4294901760
    %1922 = vmatpush1.msra.mxu0 %v1921
    %1923 = vmatprep.subr.mxu0 0.0
    %v1924 = vand.u32 %v179, 4294901760
    %1925 = vmatpush1.msra.mxu0 %v1924
    %1926 = vmatprep.subr.mxu0 0.0
    %v1927 = vand.u32 %v180, 4294901760
    %1928 = vmatpush1.msra.mxu0 %v1927
    %1929 = vmatprep.subr.mxu0 0.0
    %v1930 = vand.u32 %v181, 4294901760
    %1931 = vmatpush1.msra.mxu0 %v1930
    %1932 = vmatprep.subr.mxu0 0.0
    %1933 = vmatpush1.msra.mxu0 0.0
    %1934 = vmatprep.subr.mxu0 0.0
    %1935 = vmatpush1.msra.mxu0 0.0
    %1936 = vmatprep.subr.mxu0 0.0
    %1937 = vmatpush1.msra.mxu0 0.0
    %1938 = vmatprep.subr.mxu0 0.0
    %1939 = vmatpush1.msra.mxu0 0.0
    %1940 = vmatprep.subr.mxu0 0.0
    %1941 = vmatpush1.msra.mxu0 0.0
    %1942 = vmatprep.subr.mxu0 0.0
    %1943 = vmatpush1.msra.mxu0 0.0
    %1944 = vmatprep.subr.mxu0 0.0
    %1945 = vmatpush1.msra.mxu0 0.0
    %1946 = vmatprep.subr.mxu0 0.0
    %1947 = vmatpush1.msra.mxu0 0.0
    %1948 = vmatprep.subr.mxu0 0.0
    %1949 = vmatpush1.msra.mxu0 0.0
    %1950 = vmatprep.subr.mxu0 0.0
    %1951 = vmatpush1.msra.mxu0 0.0
    %1952 = vmatprep.subr.mxu0 0.0
    %1953 = vmatpush1.msra.mxu0 0.0
    %1954 = vmatprep.subr.mxu0 0.0
    %1955 = vmatpush1.msra.mxu0 0.0
    %1956 = vmatprep.subr.mxu0 0.0
    %1957 = vmatpush1.msra.mxu0 0.0
    %1958 = vmatprep.subr.mxu0 0.0
    %1959 = vmatpush1.msra.mxu0 0.0
    %1960 = vmatprep.subr.mxu0 0.0
    %1961 = vmatpush1.msra.mxu0 0.0
    %1962 = vmatprep.subr.mxu0 0.0
    %1963 = vmatpush1.msra.mxu0 0.0
    %1964 = vmatprep.mubr.f32.mxu0 0.0
    %v1965 = vand.u32 %v130, 4294901760
    %1966 = vmatmul.mubr.f32.gmra.mrb[0].mxu0 %v1965
    %v1967 = vpop.f32.mrb[0].mxu0
    %v1968 = vadd.f32 %v1863, %v1967
    %v1969 = vpop.f32.mrb[0].mxu0
    %1970 = vmatprep.mubr.f32.mxu0 0.0
    %v1971 = vand.u32 %v131, 4294901760
    %1972 = vmatmul.mubr.f32.gmra.mrb[0].mxu0 %v1971
    %v1973 = vpop.f32.mrb[0].mxu0
    %v1974 = vadd.f32 %v1869, %v1973
    %v1975 = vpop.f32.mrb[0].mxu0
    %1976 = vmatprep.mubr.f32.mxu0 0.0
    %v1977 = vand.u32 %v132, 4294901760
    %1978 = vmatmul.mubr.f32.gmra.mrb[0].mxu0 %v1977
    %v1979 = vpop.f32.mrb[0].mxu0
    %v1980 = vadd.f32 %v1875, %v1979
    %v1981 = vpop.f32.mrb[0].mxu0
    %1982 = vmatprep.mubr.f32.mxu0 0.0
    %v1983 = vand.u32 %v133, 4294901760
    %1984 = vmatmul.mubr.f32.gmra.mrb[0].mxu0 %v1983
    %v1985 = vpop.f32.mrb[0].mxu0
    %v1986 = vadd.f32 %v1881, %v1985
    %v1987 = vpop.f32.mrb[0].mxu0
    %1988 = vdwg.mxu0
    %vm1989 = vcmp.gt.f32.partialorder %v1968, 0.0
    %vm1990 = vcmp.gt.f32.partialorder %v1974, 0.0
    %vm1991 = vcmp.gt.f32.partialorder %v1980, 0.0
    %vm1992 = vcmp.gt.f32.partialorder %v1986, 0.0
    %v1993 = vmul.f32 %v1968, 0.1
    %v1994 = vmul.f32 %v1974, 0.1
    %v1995 = vmul.f32 %v1980, 0.1
    %v1996 = vmul.f32 %v1986, 0.1
    %v1997 = vsel %vm1989, %v1968, %v1993
    %v1998 = vsel %vm1990, %v1974, %v1994
    %v1999 = vsel %vm1991, %v1980, %v1995
    %v2000 = vsel %vm1992, %v1986, %v1996
    %v2001 = vadd.f32 %v43, %v1997
    %v2002 = vadd.f32 %v44, %v1998
    %v2003 = vadd.f32 %v45, %v1999
    %v2004 = vadd.f32 %v46, %v2000
    %2005 = vst [vmem:[#allocation7] sm:$0xff] %v2001
    %2006 = vst [vmem:[#allocation7 + $0x8] sm:$0xff] %v2002
    %2007 = vst [vmem:[#allocation7 + $0x10] sm:$0xff] %v2003
    %2008 = vst [vmem:[#allocation7 + $0x18] sm:$0xff] %v2004
    // Predicated region
    $region22: #{mixconv2d_packed.1} parent=1 // pred_check
      _
    $region23: #{mixconv2d_packed.1} parent=1 // pred_check_branch
      %2010 = sbr.rel (0) target = $region25
    $region24: #{mixconv2d_packed.1} parent=1 // pred_region
      %s2012 = ssub.s32 512, 512
      %2013 = vsyncadd [#allocation4], %s2012
      %s2014 = sshll.u32 [#allocation7], 4
      %s2015 = int_to_ptr.vmem [resolvable:$true] %s2014
      %2020 = dma.vmem_to_hbm [thread:$0]  %s2015, 512, %s3, [#allocation4], 128, 128, 8
    $region25: #{mixconv2d_packed.1} parent=1 // pred_fallthru
      _
    // Predicated region
    $region26: #{mixconv2d_packed.1} parent=1 // pred_check
      _
    $region27: #{mixconv2d_packed.1} parent=1 // pred_check_branch
      %2022 = sbr.rel (0) target = $region29
    $region28: #{mixconv2d_packed.1} parent=1 // pred_region
      %2023 = dma.done [#allocation4], 512
    $region29: #{mixconv2d_packed.1} parent=1 // pred_fallthru
      _
    %2024 = vsyncpa [#allocation3], 1
    %2025 = vsyncpa [#allocation6], 1
    %2026 = vsyncpa [#allocation4], 1

</llo_original>
